<compile_context>
chip_gen: v5e
topology: v5e:2x2
jax: 0.10.0
libtpu: 0.0.40
codegen_flags: <defaults>
</compile_context>

<pallas_src>
import functools

import jax
import jax.numpy as jnp
from jax.experimental import pallas as pl
from jax.experimental.pallas import tpu as pltpu


# ---------------------------------------------------------------------------
# Fused whole-stack Pallas kernel
# ---------------------------------------------------------------------------

def _make_tcn_kernel(layer_cfgs, L, C):
    """Builds the fused TCN kernel for one batch element.

    layer_cfgs: tuple of (K, dilation, has_downsample) per TemporalBlock.
    Ref layout (all channel dims padded to C):
      refs[0]        : x        (L, C)
      per layer      : w1 (K*C, C), b1 (1, C), w2 (K*C, C), b2 (1, C),
                       [wd (C, C), bd (1, C)]  if has_downsample
      refs[-1]       : out      (L, C)
    """

    def kernel(*refs):
        x_ref = refs[0]
        out_ref = refs[-1]
        pr = refs[1:-1]

        a = x_ref[...]                                   # (L, C) f32 activation
        i = 0
        for (K, d, has_ds) in layer_cfgs:
            w1, b1, w2, b2 = pr[i], pr[i + 1], pr[i + 2], pr[i + 3]
            i += 4
            if has_ds:
                wd, bd = pr[i], pr[i + 1]
                i += 2
            pad = (K - 1) * d

            def causal_conv_relu(inp, w_ref, b_ref, pad=pad, d=d, K=K):
                # causal left zero-pad inside the kernel (== PyTorch pad+Chomp1d)
                xp = jnp.concatenate(
                    [jnp.zeros((pad, C), jnp.float32), inp], axis=0)   # (L+pad, C)
                # im2col: one lane-dense matmul instead of K tiny ones
                slab = jnp.concatenate(
                    [xp[k * d:k * d + L, :] for k in range(K)], axis=1)  # (L, K*C)
                y = jnp.dot(slab, w_ref[...],
                            preferred_element_type=jnp.float32) + b_ref[...]
                return jnp.maximum(y, 0.0)               # ReLU (dropout = identity)

            h = causal_conv_relu(a, w1, b1)              # conv1 branch
            o = causal_conv_relu(h, w2, b2)              # conv2 branch
            if has_ds:                                   # 1x1 downsample
                res = jnp.dot(a, wd[...],
                              preferred_element_type=jnp.float32) + bd[...]
            else:                                        # downsample is None
                res = a
            a = jnp.maximum(o + res, 0.0)                # block output ReLU

        out_ref[...] = a.astype(out_ref.dtype)

    return kernel


# ---------------------------------------------------------------------------
# Parameter packing (channel padding + im2col weight layout) -- done once
# ---------------------------------------------------------------------------

def _round_up(x, m):
    return ((x + m - 1) // m) * m


def _pack_conv_w(w_kio, cpad):
    K, cin, cout = w_kio.shape
    wp = jnp.zeros((K, cpad, cpad), jnp.float32).at[:, :cin, :cout].set(w_kio)
    return wp.reshape(K * cpad, cpad)                    # (K*C, C)


def _pack_mat(w_io, cpad):
    cin, cout = w_io.shape
    return jnp.zeros((cpad, cpad), jnp.float32).at[:cin, :cout].set(w_io)


def _pack_bias(b, cpad):
    return jnp.zeros((1, cpad), jnp.float32).at[0, :b.shape[0]].set(b)


def pack_tcn_params(params_raw, kernel_size, num_inputs):
    max_c = max([num_inputs] + [p["b1"].shape[0] for p in params_raw])
    cpad = _round_up(max(max_c, 128), 128)               # lane-dense channel width
    cfgs, flat = [], []
    for i, p in enumerate(params_raw):
        d = 2 ** i
        has_ds = p["wd"] is not None
        cfgs.append((kernel_size, d, has_ds))
        flat += [_pack_conv_w(p["w1"], cpad), _pack_bias(p["b1"], cpad),
                 _pack_conv_w(p["w2"], cpad), _pack_bias(p["b2"], cpad)]
        if has_ds:
            flat += [_pack_mat(p["wd"], cpad), _pack_bias(p["bd"], cpad)]
    c_last = params_raw[-1]["b1"].shape[0]
    return tuple(cfgs), flat, cpad, c_last


# ---------------------------------------------------------------------------
# Forward pass: one pallas_call for the whole TCN
# ---------------------------------------------------------------------------

def tcn_forward(x_ncl, params_raw, kernel_size):
    """TemporalConvNet forward.  x_ncl: (N, C_in, L) -> (N, C_last, L)."""
    N, cin, L = x_ncl.shape
    cfgs, flat, cpad, c_last = pack_tcn_params(params_raw, kernel_size, cin)

    # NCL -> NLC and pad channels to the lane-dense width (tiny, one-time ops).
    x = jnp.transpose(x_ncl, (0, 2, 1)).astype(jnp.float32)
    if cpad > cin:
        x = jnp.pad(x, ((0, 0), (0, 0), (0, cpad - cin)))

    in_specs = [pl.BlockSpec((None, L, cpad), lambda n: (n, 0, 0))]
    in_specs += [pl.BlockSpec(a.shape, lambda n: (0, 0)) for a in flat]

    out = pl.pallas_call(
        _make_tcn_kernel(cfgs, L, cpad),
        out_shape=jax.ShapeDtypeStruct((N, L, cpad), jnp.float32),
        grid=(N,),
        in_specs=in_specs,
        out_specs=pl.BlockSpec((None, L, cpad), lambda n: (n, 0, 0)),
        compiler_params=pltpu.CompilerParams(dimension_semantics=("parallel",)),
    )(x, *flat)

    return jnp.transpose(out[:, :, :c_last], (0, 2, 1))  # NLC -> NCL


# ---------------------------------------------------------------------------
# Deterministic parameter setup (matches the PyTorch module shapes)
# ---------------------------------------------------------------------------

def init_tcn_params(key, num_inputs, num_channels, kernel_size):
    params = []
    in_c = num_inputs
    for out_c in num_channels:
        key, k1, k2, k3, k4, k5, k6 = jax.random.split(key, 7)
        # weight_norm: w = g * v/||v||; g initialized to ||v|| => w == v at init.
        v1 = 0.01 * jax.random.normal(k1, (out_c, in_c, kernel_size), jnp.float32)
        w1 = jnp.transpose(v1, (2, 1, 0))                # (K, Cin, Cout)
        b1 = 0.01 * jax.random.normal(k2, (out_c,), jnp.float32)

        v2 = 0.01 * jax.random.normal(k3, (out_c, out_c, kernel_size), jnp.float32)
        w2 = jnp.transpose(v2, (2, 1, 0))                # (K, Cout, Cout)
        b2 = 0.01 * jax.random.normal(k4, (out_c,), jnp.float32)

        if in_c != out_c:
            wd = jnp.transpose(
                0.01 * jax.random.normal(k5, (out_c, in_c), jnp.float32), (1, 0))
            bd = 0.01 * jax.random.normal(k6, (out_c,), jnp.float32)
        else:
            wd, bd = None, None                          # PyTorch downsample=None

        params.append(dict(w1=w1, b1=b1, w2=w2, b2=b2, wd=wd, bd=bd))
        in_c = out_c
    return params


# ---------------------------------------------------------------------------
# Pure-JAX reference (correctness check)
# ---------------------------------------------------------------------------

def _ref_causal_conv(x, w, b, dilation):
    N, L, _ = x.shape
    K = w.shape[0]
    pad = (K - 1) * dilation
    xp = jnp.pad(x, ((0, 0), (pad, 0), (0, 0)))
    y = jnp.zeros((N, L, w.shape[2]), jnp.float32) + b
    for k in range(K):
        y = y + jnp.einsum('nli,io->nlo',
                           xp[:, k * dilation:k * dilation + L, :], w[k])
    return y


def tcn_reference(x_ncl, params_raw, kernel_size):
    x = jnp.transpose(x_ncl, (0, 2, 1))
    for i, p in enumerate(params_raw):
        d = 2 ** i
        h = jax.nn.relu(_ref_causal_conv(x, p["w1"], p["b1"], d))
        o = jax.nn.relu(_ref_causal_conv(h, p["w2"], p["b2"], d))
        if p["wd"] is not None:
            res = jnp.einsum('nli,io->nlo', x, p["wd"]) + p["bd"]
        else:
            res = x
        x = jax.nn.relu(o + res)
    return jnp.transpose(x, (0, 2, 1))


# ---------------------------------------------------------------------------

if __name__ == "__main__":
    key = jax.random.PRNGKey(0)

    num_inputs = 4
    num_channels = (8, 16, 16)     # last block exercises the identity-downsample path
    kernel_size = 5
    N, L = 2, 16

    key, kx = jax.random.split(key)
    x = jax.random.normal(kx, (N, num_inputs, L), jnp.float32)   # PyTorch NCL input
    params = init_tcn_params(key, num_inputs, num_channels, kernel_size)

    y = jax.block_until_ready(tcn_forward(x, params, kernel_size))

    assert y.shape == (N, num_channels[-1], L), y.shape
    y_ref = tcn_reference(x, params, kernel_size)
    assert jnp.allclose(y, y_ref, atol=1e-4, rtol=1e-4), "mismatch vs reference"

    print("KERNEL_OK")
</pallas_src>

<mosaic_0001>
module attributes {stable_mosaic.version = 11 : i64} {
  func.func @kernel(%arg0: i32, %arg1: memref<1x16x128xf32, #tpu.memory_space<vmem>>, %arg2: memref<640x128xf32, #tpu.memory_space<vmem>>, %arg3: memref<1x128xf32, #tpu.memory_space<vmem>>, %arg4: memref<640x128xf32, #tpu.memory_space<vmem>>, %arg5: memref<1x128xf32, #tpu.memory_space<vmem>>, %arg6: memref<128x128xf32, #tpu.memory_space<vmem>>, %arg7: memref<1x128xf32, #tpu.memory_space<vmem>>, %arg8: memref<640x128xf32, #tpu.memory_space<vmem>>, %arg9: memref<1x128xf32, #tpu.memory_space<vmem>>, %arg10: memref<640x128xf32, #tpu.memory_space<vmem>>, %arg11: memref<1x128xf32, #tpu.memory_space<vmem>>, %arg12: memref<128x128xf32, #tpu.memory_space<vmem>>, %arg13: memref<1x128xf32, #tpu.memory_space<vmem>>, %arg14: memref<640x128xf32, #tpu.memory_space<vmem>>, %arg15: memref<1x128xf32, #tpu.memory_space<vmem>>, %arg16: memref<640x128xf32, #tpu.memory_space<vmem>>, %arg17: memref<1x128xf32, #tpu.memory_space<vmem>>, %arg18: memref<1x16x128xf32, #tpu.memory_space<vmem>>) attributes {dimension_semantics = [#tpu.dimension_semantics<parallel>], iteration_bounds = array<i64: 2>, scalar_prefetch = 0 : i64, scratch_operands = 0 : i64, tpu.core_type = #tpu.core_type<tc>, window_params = [{transform_indices = @transform_0, window_bounds = array<i64: 1, 16, 128>}, {pipeline_mode = #tpu.pipeline_mode<synchronous>, transform_indices = @transform_1, window_bounds = array<i64: 640, 128>}, {pipeline_mode = #tpu.pipeline_mode<synchronous>, transform_indices = @transform_2, window_bounds = array<i64: 1, 128>}, {pipeline_mode = #tpu.pipeline_mode<synchronous>, transform_indices = @transform_3, window_bounds = array<i64: 640, 128>}, {pipeline_mode = #tpu.pipeline_mode<synchronous>, transform_indices = @transform_4, window_bounds = array<i64: 1, 128>}, {pipeline_mode = #tpu.pipeline_mode<synchronous>, transform_indices = @transform_5, window_bounds = array<i64: 128, 128>}, {pipeline_mode = #tpu.pipeline_mode<synchronous>, transform_indices = @transform_6, window_bounds = array<i64: 1, 128>}, {pipeline_mode = #tpu.pipeline_mode<synchronous>, transform_indices = @transform_7, window_bounds = array<i64: 640, 128>}, {pipeline_mode = #tpu.pipeline_mode<synchronous>, transform_indices = @transform_8, window_bounds = array<i64: 1, 128>}, {pipeline_mode = #tpu.pipeline_mode<synchronous>, transform_indices = @transform_9, window_bounds = array<i64: 640, 128>}, {pipeline_mode = #tpu.pipeline_mode<synchronous>, transform_indices = @transform_10, window_bounds = array<i64: 1, 128>}, {pipeline_mode = #tpu.pipeline_mode<synchronous>, transform_indices = @transform_11, window_bounds = array<i64: 128, 128>}, {pipeline_mode = #tpu.pipeline_mode<synchronous>, transform_indices = @transform_12, window_bounds = array<i64: 1, 128>}, {pipeline_mode = #tpu.pipeline_mode<synchronous>, transform_indices = @transform_13, window_bounds = array<i64: 640, 128>}, {pipeline_mode = #tpu.pipeline_mode<synchronous>, transform_indices = @transform_14, window_bounds = array<i64: 1, 128>}, {pipeline_mode = #tpu.pipeline_mode<synchronous>, transform_indices = @transform_15, window_bounds = array<i64: 640, 128>}, {pipeline_mode = #tpu.pipeline_mode<synchronous>, transform_indices = @transform_16, window_bounds = array<i64: 1, 128>}, {transform_indices = @transform_17, window_bounds = array<i64: 1, 16, 128>}]} {
    %c0 = arith.constant 0 : index
    %c0_0 = arith.constant 0 : index
    %c0_1 = arith.constant 0 : index
    %0 = vector.load %arg1[%c0, %c0_0, %c0_1] : memref<1x16x128xf32, #tpu.memory_space<vmem>>, vector<1x16x128xf32>
    %1 = vector.shape_cast %0 : vector<1x16x128xf32> to vector<16x128xf32>
    %cst = arith.constant 0.000000e+00 : f32
    %2 = vector.broadcast %cst : f32 to vector<4x128xf32>
    %3 = tpu.concatenate %2, %1 in 0 : vector<4x128xf32>, vector<16x128xf32> -> vector<20x128xf32>
    %4 = vector.extract_strided_slice %3 {offsets = [0, 0], sizes = [16, 128], strides = [1, 1]} : vector<20x128xf32> to vector<16x128xf32>
    %5 = vector.extract_strided_slice %3 {offsets = [1, 0], sizes = [16, 128], strides = [1, 1]} : vector<20x128xf32> to vector<16x128xf32>
    %6 = vector.extract_strided_slice %3 {offsets = [2, 0], sizes = [16, 128], strides = [1, 1]} : vector<20x128xf32> to vector<16x128xf32>
    %7 = vector.extract_strided_slice %3 {offsets = [3, 0], sizes = [16, 128], strides = [1, 1]} : vector<20x128xf32> to vector<16x128xf32>
    %8 = vector.extract_strided_slice %3 {offsets = [4, 0], sizes = [16, 128], strides = [1, 1]} : vector<20x128xf32> to vector<16x128xf32>
    %9 = tpu.concatenate %4, %5, %6, %7, %8 in 1 : vector<16x128xf32>, vector<16x128xf32>, vector<16x128xf32>, vector<16x128xf32>, vector<16x128xf32> -> vector<16x640xf32>
    %c0_2 = arith.constant 0 : index
    %c0_3 = arith.constant 0 : index
    %10 = vector.load %arg2[%c0_2, %c0_3] : memref<640x128xf32, #tpu.memory_space<vmem>>, vector<640x128xf32>
    %cst_4 = arith.constant dense<0.000000e+00> : vector<16x128xf32>
    %11 = tpu.matmul %9, %10, %cst_4 {dimension_numbers = #tpu.dot_dimension_numbers<[1], [0], [0], [1], [0, 0, 1, 1], [], []>} : vector<16x640xf32>, vector<640x128xf32>, vector<16x128xf32> -> vector<16x128xf32>
    %c0_5 = arith.constant 0 : index
    %c0_6 = arith.constant 0 : index
    %12 = vector.load %arg3[%c0_5, %c0_6] : memref<1x128xf32, #tpu.memory_space<vmem>>, vector<1x128xf32>
    %13 = vector.broadcast %12 : vector<1x128xf32> to vector<16x128xf32>
    %14 = arith.addf %11, %13 : vector<16x128xf32>
    %cst_7 = arith.constant 0.000000e+00 : f32
    %15 = vector.broadcast %cst_7 : f32 to vector<16x128xf32>
    %16 = arith.maximumf %14, %15 : vector<16x128xf32>
    %cst_8 = arith.constant 0.000000e+00 : f32
    %17 = vector.broadcast %cst_8 : f32 to vector<4x128xf32>
    %18 = tpu.concatenate %17, %16 in 0 : vector<4x128xf32>, vector<16x128xf32> -> vector<20x128xf32>
    %19 = vector.extract_strided_slice %18 {offsets = [0, 0], sizes = [16, 128], strides = [1, 1]} : vector<20x128xf32> to vector<16x128xf32>
    %20 = vector.extract_strided_slice %18 {offsets = [1, 0], sizes = [16, 128], strides = [1, 1]} : vector<20x128xf32> to vector<16x128xf32>
    %21 = vector.extract_strided_slice %18 {offsets = [2, 0], sizes = [16, 128], strides = [1, 1]} : vector<20x128xf32> to vector<16x128xf32>
    %22 = vector.extract_strided_slice %18 {offsets = [3, 0], sizes = [16, 128], strides = [1, 1]} : vector<20x128xf32> to vector<16x128xf32>
    %23 = vector.extract_strided_slice %18 {offsets = [4, 0], sizes = [16, 128], strides = [1, 1]} : vector<20x128xf32> to vector<16x128xf32>
    %24 = tpu.concatenate %19, %20, %21, %22, %23 in 1 : vector<16x128xf32>, vector<16x128xf32>, vector<16x128xf32>, vector<16x128xf32>, vector<16x128xf32> -> vector<16x640xf32>
    %c0_9 = arith.constant 0 : index
    %c0_10 = arith.constant 0 : index
    %25 = vector.load %arg4[%c0_9, %c0_10] : memref<640x128xf32, #tpu.memory_space<vmem>>, vector<640x128xf32>
    %cst_11 = arith.constant dense<0.000000e+00> : vector<16x128xf32>
    %26 = tpu.matmul %24, %25, %cst_11 {dimension_numbers = #tpu.dot_dimension_numbers<[1], [0], [0], [1], [0, 0, 1, 1], [], []>} : vector<16x640xf32>, vector<640x128xf32>, vector<16x128xf32> -> vector<16x128xf32>
    %c0_12 = arith.constant 0 : index
    %c0_13 = arith.constant 0 : index
    %27 = vector.load %arg5[%c0_12, %c0_13] : memref<1x128xf32, #tpu.memory_space<vmem>>, vector<1x128xf32>
    %28 = vector.broadcast %27 : vector<1x128xf32> to vector<16x128xf32>
    %29 = arith.addf %26, %28 : vector<16x128xf32>
    %cst_14 = arith.constant 0.000000e+00 : f32
    %30 = vector.broadcast %cst_14 : f32 to vector<16x128xf32>
    %31 = arith.maximumf %29, %30 : vector<16x128xf32>
    %c0_15 = arith.constant 0 : index
    %c0_16 = arith.constant 0 : index
    %32 = vector.load %arg6[%c0_15, %c0_16] : memref<128x128xf32, #tpu.memory_space<vmem>>, vector<128x128xf32>
    %cst_17 = arith.constant dense<0.000000e+00> : vector<16x128xf32>
    %33 = tpu.matmul %1, %32, %cst_17 {dimension_numbers = #tpu.dot_dimension_numbers<[1], [0], [0], [1], [0, 0, 1, 1], [], []>} : vector<16x128xf32>, vector<128x128xf32>, vector<16x128xf32> -> vector<16x128xf32>
    %c0_18 = arith.constant 0 : index
    %c0_19 = arith.constant 0 : index
    %34 = vector.load %arg7[%c0_18, %c0_19] : memref<1x128xf32, #tpu.memory_space<vmem>>, vector<1x128xf32>
    %35 = vector.broadcast %34 : vector<1x128xf32> to vector<16x128xf32>
    %36 = arith.addf %33, %35 : vector<16x128xf32>
    %37 = arith.addf %31, %36 : vector<16x128xf32>
    %cst_20 = arith.constant 0.000000e+00 : f32
    %38 = vector.broadcast %cst_20 : f32 to vector<16x128xf32>
    %39 = arith.maximumf %37, %38 : vector<16x128xf32>
    %cst_21 = arith.constant 0.000000e+00 : f32
    %40 = vector.broadcast %cst_21 : f32 to vector<8x128xf32>
    %41 = tpu.concatenate %40, %39 in 0 : vector<8x128xf32>, vector<16x128xf32> -> vector<24x128xf32>
    %42 = vector.extract_strided_slice %41 {offsets = [0, 0], sizes = [16, 128], strides = [1, 1]} : vector<24x128xf32> to vector<16x128xf32>
    %43 = vector.extract_strided_slice %41 {offsets = [2, 0], sizes = [16, 128], strides = [1, 1]} : vector<24x128xf32> to vector<16x128xf32>
    %44 = vector.extract_strided_slice %41 {offsets = [4, 0], sizes = [16, 128], strides = [1, 1]} : vector<24x128xf32> to vector<16x128xf32>
    %45 = vector.extract_strided_slice %41 {offsets = [6, 0], sizes = [16, 128], strides = [1, 1]} : vector<24x128xf32> to vector<16x128xf32>
    %46 = vector.extract_strided_slice %41 {offsets = [8, 0], sizes = [16, 128], strides = [1, 1]} : vector<24x128xf32> to vector<16x128xf32>
    %47 = tpu.concatenate %42, %43, %44, %45, %46 in 1 : vector<16x128xf32>, vector<16x128xf32>, vector<16x128xf32>, vector<16x128xf32>, vector<16x128xf32> -> vector<16x640xf32>
    %c0_22 = arith.constant 0 : index
    %c0_23 = arith.constant 0 : index
    %48 = vector.load %arg8[%c0_22, %c0_23] : memref<640x128xf32, #tpu.memory_space<vmem>>, vector<640x128xf32>
    %cst_24 = arith.constant dense<0.000000e+00> : vector<16x128xf32>
    %49 = tpu.matmul %47, %48, %cst_24 {dimension_numbers = #tpu.dot_dimension_numbers<[1], [0], [0], [1], [0, 0, 1, 1], [], []>} : vector<16x640xf32>, vector<640x128xf32>, vector<16x128xf32> -> vector<16x128xf32>
    %c0_25 = arith.constant 0 : index
    %c0_26 = arith.constant 0 : index
    %50 = vector.load %arg9[%c0_25, %c0_26] : memref<1x128xf32, #tpu.memory_space<vmem>>, vector<1x128xf32>
    %51 = vector.broadcast %50 : vector<1x128xf32> to vector<16x128xf32>
    %52 = arith.addf %49, %51 : vector<16x128xf32>
    %cst_27 = arith.constant 0.000000e+00 : f32
    %53 = vector.broadcast %cst_27 : f32 to vector<16x128xf32>
    %54 = arith.maximumf %52, %53 : vector<16x128xf32>
    %cst_28 = arith.constant 0.000000e+00 : f32
    %55 = vector.broadcast %cst_28 : f32 to vector<8x128xf32>
    %56 = tpu.concatenate %55, %54 in 0 : vector<8x128xf32>, vector<16x128xf32> -> vector<24x128xf32>
    %57 = vector.extract_strided_slice %56 {offsets = [0, 0], sizes = [16, 128], strides = [1, 1]} : vector<24x128xf32> to vector<16x128xf32>
    %58 = vector.extract_strided_slice %56 {offsets = [2, 0], sizes = [16, 128], strides = [1, 1]} : vector<24x128xf32> to vector<16x128xf32>
    %59 = vector.extract_strided_slice %56 {offsets = [4, 0], sizes = [16, 128], strides = [1, 1]} : vector<24x128xf32> to vector<16x128xf32>
    %60 = vector.extract_strided_slice %56 {offsets = [6, 0], sizes = [16, 128], strides = [1, 1]} : vector<24x128xf32> to vector<16x128xf32>
    %61 = vector.extract_strided_slice %56 {offsets = [8, 0], sizes = [16, 128], strides = [1, 1]} : vector<24x128xf32> to vector<16x128xf32>
    %62 = tpu.concatenate %57, %58, %59, %60, %61 in 1 : vector<16x128xf32>, vector<16x128xf32>, vector<16x128xf32>, vector<16x128xf32>, vector<16x128xf32> -> vector<16x640xf32>
    %c0_29 = arith.constant 0 : index
    %c0_30 = arith.constant 0 : index
    %63 = vector.load %arg10[%c0_29, %c0_30] : memref<640x128xf32, #tpu.memory_space<vmem>>, vector<640x128xf32>
    %cst_31 = arith.constant dense<0.000000e+00> : vector<16x128xf32>
    %64 = tpu.matmul %62, %63, %cst_31 {dimension_numbers = #tpu.dot_dimension_numbers<[1], [0], [0], [1], [0, 0, 1, 1], [], []>} : vector<16x640xf32>, vector<640x128xf32>, vector<16x128xf32> -> vector<16x128xf32>
    %c0_32 = arith.constant 0 : index
    %c0_33 = arith.constant 0 : index
    %65 = vector.load %arg11[%c0_32, %c0_33] : memref<1x128xf32, #tpu.memory_space<vmem>>, vector<1x128xf32>
    %66 = vector.broadcast %65 : vector<1x128xf32> to vector<16x128xf32>
    %67 = arith.addf %64, %66 : vector<16x128xf32>
    %cst_34 = arith.constant 0.000000e+00 : f32
    %68 = vector.broadcast %cst_34 : f32 to vector<16x128xf32>
    %69 = arith.maximumf %67, %68 : vector<16x128xf32>
    %c0_35 = arith.constant 0 : index
    %c0_36 = arith.constant 0 : index
    %70 = vector.load %arg12[%c0_35, %c0_36] : memref<128x128xf32, #tpu.memory_space<vmem>>, vector<128x128xf32>
    %cst_37 = arith.constant dense<0.000000e+00> : vector<16x128xf32>
    %71 = tpu.matmul %39, %70, %cst_37 {dimension_numbers = #tpu.dot_dimension_numbers<[1], [0], [0], [1], [0, 0, 1, 1], [], []>} : vector<16x128xf32>, vector<128x128xf32>, vector<16x128xf32> -> vector<16x128xf32>
    %c0_38 = arith.constant 0 : index
    %c0_39 = arith.constant 0 : index
    %72 = vector.load %arg13[%c0_38, %c0_39] : memref<1x128xf32, #tpu.memory_space<vmem>>, vector<1x128xf32>
    %73 = vector.broadcast %72 : vector<1x128xf32> to vector<16x128xf32>
    %74 = arith.addf %71, %73 : vector<16x128xf32>
    %75 = arith.addf %69, %74 : vector<16x128xf32>
    %cst_40 = arith.constant 0.000000e+00 : f32
    %76 = vector.broadcast %cst_40 : f32 to vector<16x128xf32>
    %77 = arith.maximumf %75, %76 : vector<16x128xf32>
    %cst_41 = arith.constant 0.000000e+00 : f32
    %78 = vector.broadcast %cst_41 : f32 to vector<16x128xf32>
    %79 = tpu.concatenate %78, %77 in 0 : vector<16x128xf32>, vector<16x128xf32> -> vector<32x128xf32>
    %80 = vector.extract_strided_slice %79 {offsets = [0, 0], sizes = [16, 128], strides = [1, 1]} : vector<32x128xf32> to vector<16x128xf32>
    %81 = vector.extract_strided_slice %79 {offsets = [4, 0], sizes = [16, 128], strides = [1, 1]} : vector<32x128xf32> to vector<16x128xf32>
    %82 = vector.extract_strided_slice %79 {offsets = [8, 0], sizes = [16, 128], strides = [1, 1]} : vector<32x128xf32> to vector<16x128xf32>
    %83 = vector.extract_strided_slice %79 {offsets = [12, 0], sizes = [16, 128], strides = [1, 1]} : vector<32x128xf32> to vector<16x128xf32>
    %84 = vector.extract_strided_slice %79 {offsets = [16, 0], sizes = [16, 128], strides = [1, 1]} : vector<32x128xf32> to vector<16x128xf32>
    %85 = tpu.concatenate %80, %81, %82, %83, %84 in 1 : vector<16x128xf32>, vector<16x128xf32>, vector<16x128xf32>, vector<16x128xf32>, vector<16x128xf32> -> vector<16x640xf32>
    %c0_42 = arith.constant 0 : index
    %c0_43 = arith.constant 0 : index
    %86 = vector.load %arg14[%c0_42, %c0_43] : memref<640x128xf32, #tpu.memory_space<vmem>>, vector<640x128xf32>
    %cst_44 = arith.constant dense<0.000000e+00> : vector<16x128xf32>
    %87 = tpu.matmul %85, %86, %cst_44 {dimension_numbers = #tpu.dot_dimension_numbers<[1], [0], [0], [1], [0, 0, 1, 1], [], []>} : vector<16x640xf32>, vector<640x128xf32>, vector<16x128xf32> -> vector<16x128xf32>
    %c0_45 = arith.constant 0 : index
    %c0_46 = arith.constant 0 : index
    %88 = vector.load %arg15[%c0_45, %c0_46] : memref<1x128xf32, #tpu.memory_space<vmem>>, vector<1x128xf32>
    %89 = vector.broadcast %88 : vector<1x128xf32> to vector<16x128xf32>
    %90 = arith.addf %87, %89 : vector<16x128xf32>
    %cst_47 = arith.constant 0.000000e+00 : f32
    %91 = vector.broadcast %cst_47 : f32 to vector<16x128xf32>
    %92 = arith.maximumf %90, %91 : vector<16x128xf32>
    %cst_48 = arith.constant 0.000000e+00 : f32
    %93 = vector.broadcast %cst_48 : f32 to vector<16x128xf32>
    %94 = tpu.concatenate %93, %92 in 0 : vector<16x128xf32>, vector<16x128xf32> -> vector<32x128xf32>
    %95 = vector.extract_strided_slice %94 {offsets = [0, 0], sizes = [16, 128], strides = [1, 1]} : vector<32x128xf32> to vector<16x128xf32>
    %96 = vector.extract_strided_slice %94 {offsets = [4, 0], sizes = [16, 128], strides = [1, 1]} : vector<32x128xf32> to vector<16x128xf32>
    %97 = vector.extract_strided_slice %94 {offsets = [8, 0], sizes = [16, 128], strides = [1, 1]} : vector<32x128xf32> to vector<16x128xf32>
    %98 = vector.extract_strided_slice %94 {offsets = [12, 0], sizes = [16, 128], strides = [1, 1]} : vector<32x128xf32> to vector<16x128xf32>
    %99 = vector.extract_strided_slice %94 {offsets = [16, 0], sizes = [16, 128], strides = [1, 1]} : vector<32x128xf32> to vector<16x128xf32>
    %100 = tpu.concatenate %95, %96, %97, %98, %99 in 1 : vector<16x128xf32>, vector<16x128xf32>, vector<16x128xf32>, vector<16x128xf32>, vector<16x128xf32> -> vector<16x640xf32>
    %c0_49 = arith.constant 0 : index
    %c0_50 = arith.constant 0 : index
    %101 = vector.load %arg16[%c0_49, %c0_50] : memref<640x128xf32, #tpu.memory_space<vmem>>, vector<640x128xf32>
    %cst_51 = arith.constant dense<0.000000e+00> : vector<16x128xf32>
    %102 = tpu.matmul %100, %101, %cst_51 {dimension_numbers = #tpu.dot_dimension_numbers<[1], [0], [0], [1], [0, 0, 1, 1], [], []>} : vector<16x640xf32>, vector<640x128xf32>, vector<16x128xf32> -> vector<16x128xf32>
    %c0_52 = arith.constant 0 : index
    %c0_53 = arith.constant 0 : index
    %103 = vector.load %arg17[%c0_52, %c0_53] : memref<1x128xf32, #tpu.memory_space<vmem>>, vector<1x128xf32>
    %104 = vector.broadcast %103 : vector<1x128xf32> to vector<16x128xf32>
    %105 = arith.addf %102, %104 : vector<16x128xf32>
    %cst_54 = arith.constant 0.000000e+00 : f32
    %106 = vector.broadcast %cst_54 : f32 to vector<16x128xf32>
    %107 = arith.maximumf %105, %106 : vector<16x128xf32>
    %108 = arith.addf %107, %77 : vector<16x128xf32>
    %cst_55 = arith.constant 0.000000e+00 : f32
    %109 = vector.broadcast %cst_55 : f32 to vector<16x128xf32>
    %110 = arith.maximumf %108, %109 : vector<16x128xf32>
    %c0_56 = arith.constant 0 : index
    %c0_57 = arith.constant 0 : index
    %c0_58 = arith.constant 0 : index
    %111 = vector.load %arg18[%c0_56, %c0_57, %c0_58] : memref<1x16x128xf32, #tpu.memory_space<vmem>>, vector<1x16x128xf32>
    %112 = vector.shape_cast %111 : vector<1x16x128xf32> to vector<16x128xf32>
    %113 = vector.shape_cast %110 : vector<16x128xf32> to vector<1x16x128xf32>
    tpu.vector_store %arg18[%c0_56, %c0_57, %c0_58], %113 {strides = array<i32>} : memref<1x16x128xf32, #tpu.memory_space<vmem>>, vector<1x16x128xf32>,
    return
  }
  func.func @transform_0(%arg0: i32) -> (i32, i32, i32) {
    %c0_i32 = arith.constant 0 : i32
    %c0_i32_0 = arith.constant 0 : i32
    %c0_i32_1 = arith.constant 0 : i32
    return %arg0, %c0_i32, %c0_i32_0 : i32, i32, i32
  }
  func.func @transform_1(%arg0: i32) -> (i32, i32) {
    %c0_i32 = arith.constant 0 : i32
    %c0_i32_0 = arith.constant 0 : i32
    %c0_i32_1 = arith.constant 0 : i32
    return %c0_i32, %c0_i32_0 : i32, i32
  }
  func.func @transform_2(%arg0: i32) -> (i32, i32) {
    %c0_i32 = arith.constant 0 : i32
    %c0_i32_0 = arith.constant 0 : i32
    %c0_i32_1 = arith.constant 0 : i32
    return %c0_i32, %c0_i32_0 : i32, i32
  }
  func.func @transform_3(%arg0: i32) -> (i32, i32) {
    %c0_i32 = arith.constant 0 : i32
    %c0_i32_0 = arith.constant 0 : i32
    %c0_i32_1 = arith.constant 0 : i32
    return %c0_i32, %c0_i32_0 : i32, i32
  }
  func.func @transform_4(%arg0: i32) -> (i32, i32) {
    %c0_i32 = arith.constant 0 : i32
    %c0_i32_0 = arith.constant 0 : i32
    %c0_i32_1 = arith.constant 0 : i32
    return %c0_i32, %c0_i32_0 : i32, i32
  }
  func.func @transform_5(%arg0: i32) -> (i32, i32) {
    %c0_i32 = arith.constant 0 : i32
    %c0_i32_0 = arith.constant 0 : i32
    %c0_i32_1 = arith.constant 0 : i32
    return %c0_i32, %c0_i32_0 : i32, i32
  }
  func.func @transform_6(%arg0: i32) -> (i32, i32) {
    %c0_i32 = arith.constant 0 : i32
    %c0_i32_0 = arith.constant 0 : i32
    %c0_i32_1 = arith.constant 0 : i32
    return %c0_i32, %c0_i32_0 : i32, i32
  }
  func.func @transform_7(%arg0: i32) -> (i32, i32) {
    %c0_i32 = arith.constant 0 : i32
    %c0_i32_0 = arith.constant 0 : i32
    %c0_i32_1 = arith.constant 0 : i32
    return %c0_i32, %c0_i32_0 : i32, i32
  }
  func.func @transform_8(%arg0: i32) -> (i32, i32) {
    %c0_i32 = arith.constant 0 : i32
    %c0_i32_0 = arith.constant 0 : i32
    %c0_i32_1 = arith.constant 0 : i32
    return %c0_i32, %c0_i32_0 : i32, i32
  }
  func.func @transform_9(%arg0: i32) -> (i32, i32) {
    %c0_i32 = arith.constant 0 : i32
    %c0_i32_0 = arith.constant 0 : i32
    %c0_i32_1 = arith.constant 0 : i32
    return %c0_i32, %c0_i32_0 : i32, i32
  }
  func.func @transform_10(%arg0: i32) -> (i32, i32) {
    %c0_i32 = arith.constant 0 : i32
    %c0_i32_0 = arith.constant 0 : i32
    %c0_i32_1 = arith.constant 0 : i32
    return %c0_i32, %c0_i32_0 : i32, i32
  }
  func.func @transform_11(%arg0: i32) -> (i32, i32) {
    %c0_i32 = arith.constant 0 : i32
    %c0_i32_0 = arith.constant 0 : i32
    %c0_i32_1 = arith.constant 0 : i32
    return %c0_i32, %c0_i32_0 : i32, i32
  }
  func.func @transform_12(%arg0: i32) -> (i32, i32) {
    %c0_i32 = arith.constant 0 : i32
    %c0_i32_0 = arith.constant 0 : i32
    %c0_i32_1 = arith.constant 0 : i32
    return %c0_i32, %c0_i32_0 : i32, i32
  }
  func.func @transform_13(%arg0: i32) -> (i32, i32) {
    %c0_i32 = arith.constant 0 : i32
    %c0_i32_0 = arith.constant 0 : i32
    %c0_i32_1 = arith.constant 0 : i32
    return %c0_i32, %c0_i32_0 : i32, i32
  }
  func.func @transform_14(%arg0: i32) -> (i32, i32) {
    %c0_i32 = arith.constant 0 : i32
    %c0_i32_0 = arith.constant 0 : i32
    %c0_i32_1 = arith.constant 0 : i32
    return %c0_i32, %c0_i32_0 : i32, i32
  }
  func.func @transform_15(%arg0: i32) -> (i32, i32) {
    %c0_i32 = arith.constant 0 : i32
    %c0_i32_0 = arith.constant 0 : i32
    %c0_i32_1 = arith.constant 0 : i32
    return %c0_i32, %c0_i32_0 : i32, i32
  }
  func.func @transform_16(%arg0: i32) -> (i32, i32) {
    %c0_i32 = arith.constant 0 : i32
    %c0_i32_0 = arith.constant 0 : i32
    %c0_i32_1 = arith.constant 0 : i32
    return %c0_i32, %c0_i32_0 : i32, i32
  }
  func.func @transform_17(%arg0: i32) -> (i32, i32, i32) {
    %c0_i32 = arith.constant 0 : i32
    %c0_i32_0 = arith.constant 0 : i32
    %c0_i32_1 = arith.constant 0 : i32
    return %arg0, %c0_i32, %c0_i32_0 : i32, i32, i32
  }
}

</mosaic_0001>

<llo_original>
// kernel: tpu_custom_call.1
$region0: #{tpu_custom_call.1}
  #allocation0 [shape = 'u32[]', space=smem, size = 0x4, offset = 0x4, fixed_abs, tag = 'smem constant byte address 0x4 - core index']
  #allocation1 [shape = 'u32[72,128]{1,0:T(1,128)}', space=vmem, size = 0x9000, scoped, tag = 'internal scratch']
  %s0 = inlined_call_operand.hbm [shape: f32[2,16,128], index: 0, kind: input, shape index: {}]
  %s1 = inlined_call_operand.hbm [shape: f32[640,128], index: 1, kind: input, shape index: {}]
  %s2 = inlined_call_operand.vmem [shape: f32[1,128], index: 2, kind: input, shape index: {}]
  %s3 = inlined_call_operand.hbm [shape: f32[640,128], index: 3, kind: input, shape index: {}]
  %s4 = inlined_call_operand.vmem [shape: f32[1,128], index: 4, kind: input, shape index: {}]
  %s5 = inlined_call_operand.hbm [shape: f32[128,128], index: 5, kind: input, shape index: {}]
  %s6 = inlined_call_operand.vmem [shape: f32[1,128], index: 6, kind: input, shape index: {}]
  %s7 = inlined_call_operand.hbm [shape: f32[640,128], index: 7, kind: input, shape index: {}]
  %s8 = inlined_call_operand.vmem [shape: f32[1,128], index: 8, kind: input, shape index: {}]
  %s9 = inlined_call_operand.hbm [shape: f32[640,128], index: 9, kind: input, shape index: {}]
  %s10 = inlined_call_operand.vmem [shape: f32[1,128], index: 10, kind: input, shape index: {}]
  %s11 = inlined_call_operand.hbm [shape: f32[128,128], index: 11, kind: input, shape index: {}]
  %s12 = inlined_call_operand.vmem [shape: f32[1,128], index: 12, kind: input, shape index: {}]
  %s13 = inlined_call_operand.hbm [shape: f32[640,128], index: 13, kind: input, shape index: {}]
  %s14 = inlined_call_operand.vmem [shape: f32[1,128], index: 14, kind: input, shape index: {}]
  %s15 = inlined_call_operand.hbm [shape: f32[640,128], index: 15, kind: input, shape index: {}]
  %s16 = inlined_call_operand.vmem [shape: f32[1,128], index: 16, kind: input, shape index: {}]
  %s17 = inlined_call_operand.hbm [shape: f32[2,16,128], index: 17, kind: output, shape index: {}]
  %s18 = sld [smem:[#allocation0]]
  $region137: #{tpu_custom_call.1} parent=0
    _
  %s20 = ssub.s32 1, %s18
  %s21 = scalar_select 0, %s20, %s18
  $region1: #{tpu_custom_call.1} parent=0
    #allocation2 [shape = 'u8[16384]{0}', space=vmem, size = 0x4000, scoped, tag = 'input window, operand 0']
    #allocation3 [shape = 's32[2]{0}', space=sflag, size = 0x8, scoped, tag = 'scoped memory for tpu_custom_call.1']
    #allocation4 [shape = 's32[2]{0}', space=sflag, size = 0x8, scoped, tag = 'scoped memory for tpu_custom_call.1']
    #allocation5 [shape = 'u8[327680]{0}', space=vmem, size = 0x50000, scoped, tag = 'input window, operand 1, single buffered']
    #allocation6 [shape = 's32[1]{0}', space=sflag, size = 0x4, scoped, tag = 'scoped memory for tpu_custom_call.1']
    #allocation7 [shape = 'u8[327680]{0}', space=vmem, size = 0x50000, scoped, tag = 'input window, operand 3, single buffered']
    #allocation8 [shape = 'u8[65536]{0}', space=vmem, size = 0x10000, scoped, tag = 'input window, operand 5, single buffered']
    #allocation9 [shape = 's32[1]{0}', space=sflag, size = 0x4, scoped, tag = 'scoped memory for tpu_custom_call.1']
    #allocation10 [shape = 'u8[327680]{0}', space=vmem, size = 0x50000, scoped, tag = 'input window, operand 7, single buffered']
    #allocation11 [shape = 'u8[327680]{0}', space=vmem, size = 0x50000, scoped, tag = 'input window, operand 9, single buffered']
    #allocation12 [shape = 's32[1]{0}', space=sflag, size = 0x4, scoped, tag = 'scoped memory for tpu_custom_call.1']
    #allocation13 [shape = 'u8[65536]{0}', space=vmem, size = 0x10000, scoped, tag = 'input window, operand 11, single buffered']
    #allocation14 [shape = 'u8[327680]{0}', space=vmem, size = 0x50000, scoped, tag = 'input window, operand 13, single buffered']
    #allocation15 [shape = 's32[1]{0}', space=sflag, size = 0x4, scoped, tag = 'scoped memory for tpu_custom_call.1']
    #allocation16 [shape = 'u8[327680]{0}', space=vmem, size = 0x50000, scoped, tag = 'input window, operand 15, single buffered']
    #allocation17 [shape = 'u8[16384]{0}', space=vmem, size = 0x4000, scoped, tag = 'output window, operand 0']
    %22 = vsyncpa [#allocation3], 0
    %s23 = scalar_lea.sflag [#allocation3], 1
    %24 = vsyncpa %s23, 0
    %25 = vsyncpa [#allocation6], 0
    %26 = vsyncpa [#allocation9], 0
    %27 = vsyncpa [#allocation12], 0
    %28 = vsyncpa [#allocation15], 0
    %29 = vsyncpa [#allocation4], 0
    %s30 = scalar_lea.sflag [#allocation4], 1
    %31 = vsyncpa %s30, 0
    loop: start=0, step=1, limit=4
    $region2: #{tpu_custom_call.1} parent=1 // loop_pre_header
      _
    $region3: #{tpu_custom_call.1} parent=1 // loop_header
      %s33 = sphi 0, %s37
      %p34 = scmp.ge.s32.totalorder %s33, 4
      %s43 = sphi 0, %s45
      %s46 = sphi 0, %s43
      %s47 = sphi 0, %s46
      %s63 = sphi 0, %s47
      %s67 = sphi 0, %s67
      %s69 = sphi 0, %s67
      %s70 = sphi 0, %s69
      %s84 = sphi 0, %s70
      %s88 = sphi 0, %s88
      %s90 = sphi 0, %s88
      %s91 = sphi 0, %s90
      %s105 = sphi 0, %s91
      %s109 = sphi 0, %s109
      %s111 = sphi 0, %s109
      %s112 = sphi 0, %s111
      %s126 = sphi 0, %s112
      %s130 = sphi 0, %s130
      %s132 = sphi 0, %s130
      %s133 = sphi 0, %s132
      %s147 = sphi 0, %s133
      %s151 = sphi 0, %s151
      %s153 = sphi 0, %s151
      %s154 = sphi 0, %s153
      %s168 = sphi 0, %s154
      %s172 = sphi 0, %s172
      %s174 = sphi 0, %s172
      %s175 = sphi 0, %s174
      %s189 = sphi 0, %s175
      %s193 = sphi 0, %s193
      %s195 = sphi 0, %s193
      %s196 = sphi 0, %s195
      %s210 = sphi 0, %s196
      %s214 = sphi 0, %s214
      %s216 = sphi 0, %s214
      %s217 = sphi 0, %s216
      %s231 = sphi 0, %s217
      %s235 = sphi 0, %s235
      %s237 = sphi 0, %s235
      %s238 = sphi 0, %s237
      %s252 = sphi 0, %s238
      %s256 = sphi 0, %s256
      %s258 = sphi 0, %s256
      %s259 = sphi 0, %s258
      %s273 = sphi 0, %s259
      %s277 = sphi 0, %s277
      %s279 = sphi 0, %s277
      %s280 = sphi 0, %s279
      %s294 = sphi 0, %s280
      %s298 = sphi 0, %s298
      %s300 = sphi 0, %s298
      %s301 = sphi 0, %s300
      %s315 = sphi 0, %s301
      %s319 = sphi 0, %s319
      %s321 = sphi 0, %s319
      %s322 = sphi 0, %s321
      %s336 = sphi 0, %s322
      %s340 = sphi 0, %s340
      %s342 = sphi 0, %s340
      %s343 = sphi 0, %s342
      %s357 = sphi 0, %s343
      %s361 = sphi 0, %s361
      %s363 = sphi 0, %s361
      %s364 = sphi 0, %s363
      %s378 = sphi 0, %s364
      %s382 = sphi 0, %s382
      %s384 = sphi 0, %s382
      %s385 = sphi 0, %s384
      %s399 = sphi 0, %s385
      %s405 = sphi 0, %s407
      %s408 = sphi 0, %s405
      %s409 = sphi 0, %s408
      %s425 = sphi 0, %s409
    $region4: #{tpu_custom_call.1} parent=1 // loop_header_branch
      %36 = sbr.rel (%p34) target = $region8
    $region5: #{tpu_custom_call.1} parent=1 // loop_body
      %s38 = ssub.s32 %s33, 1
      %s39 = ssub.s32 %s33, 2
      %s40 = sadd.s32 %s33, 1
      %s41 = ssub.s32 %s33, %s40
      %p42 = scmp.eq.s32.totalorder %s41, 0
      %s44 = sadd.s32 %s43, 1
      %s45 = scalar_select %p42, %s43, %s44
      %p48 = pneg %p42
      %p49 = scmp.eq.s32.totalorder %s33, 1
      %p50 = por %p48, %p49
      %p51 = scmp.ne.s32.totalorder %s43, %s46
      %p52 = scmp.eq.s32.totalorder %s33, 0
      %p53 = por %p51, %p52
      %p54 = scmp.ne.s32.totalorder %s43, %s46
      %p55 = scmp.eq.s32.totalorder %s38, 1
      %p56 = por %p54, %p55
      %p57 = scmp.ne.s32.totalorder %s46, %s47
      %p58 = scmp.eq.s32.totalorder %s38, 0
      %p59 = por %p57, %p58
      %p60 = scmp.ne.s32.totalorder %s46, %s47
      %p61 = scmp.eq.s32.totalorder %s39, 1
      %p62 = por %p60, %p61
      %p64 = scmp.ne.s32.totalorder %s47, %s63
      %p65 = scmp.eq.s32.totalorder %s39, 0
      %p66 = por %p64, %p65
      %s68 = sadd.s32 %s67, 1
      %p71 = scmp.eq.s32.totalorder %s33, 1
      %p72 = scmp.ne.s32.totalorder %s67, %s69
      %p73 = scmp.eq.s32.totalorder %s33, 0
      %p74 = por %p72, %p73
      %p75 = scmp.ne.s32.totalorder %s67, %s69
      %p76 = scmp.eq.s32.totalorder %s38, 1
      %p77 = por %p75, %p76
      %p78 = scmp.ne.s32.totalorder %s69, %s70
      %p79 = scmp.eq.s32.totalorder %s38, 0
      %p80 = por %p78, %p79
      %p81 = scmp.ne.s32.totalorder %s69, %s70
      %p82 = scmp.eq.s32.totalorder %s39, 1
      %p83 = por %p81, %p82
      %p85 = scmp.ne.s32.totalorder %s70, %s84
      %p86 = scmp.eq.s32.totalorder %s39, 0
      %p87 = por %p85, %p86
      %s89 = sadd.s32 %s88, 1
      %p92 = scmp.eq.s32.totalorder %s33, 1
      %p93 = scmp.ne.s32.totalorder %s88, %s90
      %p94 = scmp.eq.s32.totalorder %s33, 0
      %p95 = por %p93, %p94
      %p96 = scmp.ne.s32.totalorder %s88, %s90
      %p97 = scmp.eq.s32.totalorder %s38, 1
      %p98 = por %p96, %p97
      %p99 = scmp.ne.s32.totalorder %s90, %s91
      %p100 = scmp.eq.s32.totalorder %s38, 0
      %p101 = por %p99, %p100
      %p102 = scmp.ne.s32.totalorder %s90, %s91
      %p103 = scmp.eq.s32.totalorder %s39, 1
      %p104 = por %p102, %p103
      %p106 = scmp.ne.s32.totalorder %s91, %s105
      %p107 = scmp.eq.s32.totalorder %s39, 0
      %p108 = por %p106, %p107
      %s110 = sadd.s32 %s109, 1
      %p113 = scmp.eq.s32.totalorder %s33, 1
      %p114 = scmp.ne.s32.totalorder %s109, %s111
      %p115 = scmp.eq.s32.totalorder %s33, 0
      %p116 = por %p114, %p115
      %p117 = scmp.ne.s32.totalorder %s109, %s111
      %p118 = scmp.eq.s32.totalorder %s38, 1
      %p119 = por %p117, %p118
      %p120 = scmp.ne.s32.totalorder %s111, %s112
      %p121 = scmp.eq.s32.totalorder %s38, 0
      %p122 = por %p120, %p121
      %p123 = scmp.ne.s32.totalorder %s111, %s112
      %p124 = scmp.eq.s32.totalorder %s39, 1
      %p125 = por %p123, %p124
      %p127 = scmp.ne.s32.totalorder %s112, %s126
      %p128 = scmp.eq.s32.totalorder %s39, 0
      %p129 = por %p127, %p128
      %s131 = sadd.s32 %s130, 1
      %p134 = scmp.eq.s32.totalorder %s33, 1
      %p135 = scmp.ne.s32.totalorder %s130, %s132
      %p136 = scmp.eq.s32.totalorder %s33, 0
      %p137 = por %p135, %p136
      %p138 = scmp.ne.s32.totalorder %s130, %s132
      %p139 = scmp.eq.s32.totalorder %s38, 1
      %p140 = por %p138, %p139
      %p141 = scmp.ne.s32.totalorder %s132, %s133
      %p142 = scmp.eq.s32.totalorder %s38, 0
      %p143 = por %p141, %p142
      %p144 = scmp.ne.s32.totalorder %s132, %s133
      %p145 = scmp.eq.s32.totalorder %s39, 1
      %p146 = por %p144, %p145
      %p148 = scmp.ne.s32.totalorder %s133, %s147
      %p149 = scmp.eq.s32.totalorder %s39, 0
      %p150 = por %p148, %p149
      %s152 = sadd.s32 %s151, 1
      %p155 = scmp.eq.s32.totalorder %s33, 1
      %p156 = scmp.ne.s32.totalorder %s151, %s153
      %p157 = scmp.eq.s32.totalorder %s33, 0
      %p158 = por %p156, %p157
      %p159 = scmp.ne.s32.totalorder %s151, %s153
      %p160 = scmp.eq.s32.totalorder %s38, 1
      %p161 = por %p159, %p160
      %p162 = scmp.ne.s32.totalorder %s153, %s154
      %p163 = scmp.eq.s32.totalorder %s38, 0
      %p164 = por %p162, %p163
      %p165 = scmp.ne.s32.totalorder %s153, %s154
      %p166 = scmp.eq.s32.totalorder %s39, 1
      %p167 = por %p165, %p166
      %p169 = scmp.ne.s32.totalorder %s154, %s168
      %p170 = scmp.eq.s32.totalorder %s39, 0
      %p171 = por %p169, %p170
      %s173 = sadd.s32 %s172, 1
      %p176 = scmp.eq.s32.totalorder %s33, 1
      %p177 = scmp.ne.s32.totalorder %s172, %s174
      %p178 = scmp.eq.s32.totalorder %s33, 0
      %p179 = por %p177, %p178
      %p180 = scmp.ne.s32.totalorder %s172, %s174
      %p181 = scmp.eq.s32.totalorder %s38, 1
      %p182 = por %p180, %p181
      %p183 = scmp.ne.s32.totalorder %s174, %s175
      %p184 = scmp.eq.s32.totalorder %s38, 0
      %p185 = por %p183, %p184
      %p186 = scmp.ne.s32.totalorder %s174, %s175
      %p187 = scmp.eq.s32.totalorder %s39, 1
      %p188 = por %p186, %p187
      %p190 = scmp.ne.s32.totalorder %s175, %s189
      %p191 = scmp.eq.s32.totalorder %s39, 0
      %p192 = por %p190, %p191
      %s194 = sadd.s32 %s193, 1
      %p197 = scmp.eq.s32.totalorder %s33, 1
      %p198 = scmp.ne.s32.totalorder %s193, %s195
      %p199 = scmp.eq.s32.totalorder %s33, 0
      %p200 = por %p198, %p199
      %p201 = scmp.ne.s32.totalorder %s193, %s195
      %p202 = scmp.eq.s32.totalorder %s38, 1
      %p203 = por %p201, %p202
      %p204 = scmp.ne.s32.totalorder %s195, %s196
      %p205 = scmp.eq.s32.totalorder %s38, 0
      %p206 = por %p204, %p205
      %p207 = scmp.ne.s32.totalorder %s195, %s196
      %p208 = scmp.eq.s32.totalorder %s39, 1
      %p209 = por %p207, %p208
      %p211 = scmp.ne.s32.totalorder %s196, %s210
      %p212 = scmp.eq.s32.totalorder %s39, 0
      %p213 = por %p211, %p212
      %s215 = sadd.s32 %s214, 1
      %p218 = scmp.eq.s32.totalorder %s33, 1
      %p219 = scmp.ne.s32.totalorder %s214, %s216
      %p220 = scmp.eq.s32.totalorder %s33, 0
      %p221 = por %p219, %p220
      %p222 = scmp.ne.s32.totalorder %s214, %s216
      %p223 = scmp.eq.s32.totalorder %s38, 1
      %p224 = por %p222, %p223
      %p225 = scmp.ne.s32.totalorder %s216, %s217
      %p226 = scmp.eq.s32.totalorder %s38, 0
      %p227 = por %p225, %p226
      %p228 = scmp.ne.s32.totalorder %s216, %s217
      %p229 = scmp.eq.s32.totalorder %s39, 1
      %p230 = por %p228, %p229
      %p232 = scmp.ne.s32.totalorder %s217, %s231
      %p233 = scmp.eq.s32.totalorder %s39, 0
      %p234 = por %p232, %p233
      %s236 = sadd.s32 %s235, 1
      %p239 = scmp.eq.s32.totalorder %s33, 1
      %p240 = scmp.ne.s32.totalorder %s235, %s237
      %p241 = scmp.eq.s32.totalorder %s33, 0
      %p242 = por %p240, %p241
      %p243 = scmp.ne.s32.totalorder %s235, %s237
      %p244 = scmp.eq.s32.totalorder %s38, 1
      %p245 = por %p243, %p244
      %p246 = scmp.ne.s32.totalorder %s237, %s238
      %p247 = scmp.eq.s32.totalorder %s38, 0
      %p248 = por %p246, %p247
      %p249 = scmp.ne.s32.totalorder %s237, %s238
      %p250 = scmp.eq.s32.totalorder %s39, 1
      %p251 = por %p249, %p250
      %p253 = scmp.ne.s32.totalorder %s238, %s252
      %p254 = scmp.eq.s32.totalorder %s39, 0
      %p255 = por %p253, %p254
      %s257 = sadd.s32 %s256, 1
      %p260 = scmp.eq.s32.totalorder %s33, 1
      %p261 = scmp.ne.s32.totalorder %s256, %s258
      %p262 = scmp.eq.s32.totalorder %s33, 0
      %p263 = por %p261, %p262
      %p264 = scmp.ne.s32.totalorder %s256, %s258
      %p265 = scmp.eq.s32.totalorder %s38, 1
      %p266 = por %p264, %p265
      %p267 = scmp.ne.s32.totalorder %s258, %s259
      %p268 = scmp.eq.s32.totalorder %s38, 0
      %p269 = por %p267, %p268
      %p270 = scmp.ne.s32.totalorder %s258, %s259
      %p271 = scmp.eq.s32.totalorder %s39, 1
      %p272 = por %p270, %p271
      %p274 = scmp.ne.s32.totalorder %s259, %s273
      %p275 = scmp.eq.s32.totalorder %s39, 0
      %p276 = por %p274, %p275
      %s278 = sadd.s32 %s277, 1
      %p281 = scmp.eq.s32.totalorder %s33, 1
      %p282 = scmp.ne.s32.totalorder %s277, %s279
      %p283 = scmp.eq.s32.totalorder %s33, 0
      %p284 = por %p282, %p283
      %p285 = scmp.ne.s32.totalorder %s277, %s279
      %p286 = scmp.eq.s32.totalorder %s38, 1
      %p287 = por %p285, %p286
      %p288 = scmp.ne.s32.totalorder %s279, %s280
      %p289 = scmp.eq.s32.totalorder %s38, 0
      %p290 = por %p288, %p289
      %p291 = scmp.ne.s32.totalorder %s279, %s280
      %p292 = scmp.eq.s32.totalorder %s39, 1
      %p293 = por %p291, %p292
      %p295 = scmp.ne.s32.totalorder %s280, %s294
      %p296 = scmp.eq.s32.totalorder %s39, 0
      %p297 = por %p295, %p296
      %s299 = sadd.s32 %s298, 1
      %p302 = scmp.eq.s32.totalorder %s33, 1
      %p303 = scmp.ne.s32.totalorder %s298, %s300
      %p304 = scmp.eq.s32.totalorder %s33, 0
      %p305 = por %p303, %p304
      %p306 = scmp.ne.s32.totalorder %s298, %s300
      %p307 = scmp.eq.s32.totalorder %s38, 1
      %p308 = por %p306, %p307
      %p309 = scmp.ne.s32.totalorder %s300, %s301
      %p310 = scmp.eq.s32.totalorder %s38, 0
      %p311 = por %p309, %p310
      %p312 = scmp.ne.s32.totalorder %s300, %s301
      %p313 = scmp.eq.s32.totalorder %s39, 1
      %p314 = por %p312, %p313
      %p316 = scmp.ne.s32.totalorder %s301, %s315
      %p317 = scmp.eq.s32.totalorder %s39, 0
      %p318 = por %p316, %p317
      %s320 = sadd.s32 %s319, 1
      %p323 = scmp.eq.s32.totalorder %s33, 1
      %p324 = scmp.ne.s32.totalorder %s319, %s321
      %p325 = scmp.eq.s32.totalorder %s33, 0
      %p326 = por %p324, %p325
      %p327 = scmp.ne.s32.totalorder %s319, %s321
      %p328 = scmp.eq.s32.totalorder %s38, 1
      %p329 = por %p327, %p328
      %p330 = scmp.ne.s32.totalorder %s321, %s322
      %p331 = scmp.eq.s32.totalorder %s38, 0
      %p332 = por %p330, %p331
      %p333 = scmp.ne.s32.totalorder %s321, %s322
      %p334 = scmp.eq.s32.totalorder %s39, 1
      %p335 = por %p333, %p334
      %p337 = scmp.ne.s32.totalorder %s322, %s336
      %p338 = scmp.eq.s32.totalorder %s39, 0
      %p339 = por %p337, %p338
      %s341 = sadd.s32 %s340, 1
      %p344 = scmp.eq.s32.totalorder %s33, 1
      %p345 = scmp.ne.s32.totalorder %s340, %s342
      %p346 = scmp.eq.s32.totalorder %s33, 0
      %p347 = por %p345, %p346
      %p348 = scmp.ne.s32.totalorder %s340, %s342
      %p349 = scmp.eq.s32.totalorder %s38, 1
      %p350 = por %p348, %p349
      %p351 = scmp.ne.s32.totalorder %s342, %s343
      %p352 = scmp.eq.s32.totalorder %s38, 0
      %p353 = por %p351, %p352
      %p354 = scmp.ne.s32.totalorder %s342, %s343
      %p355 = scmp.eq.s32.totalorder %s39, 1
      %p356 = por %p354, %p355
      %p358 = scmp.ne.s32.totalorder %s343, %s357
      %p359 = scmp.eq.s32.totalorder %s39, 0
      %p360 = por %p358, %p359
      %s362 = sadd.s32 %s361, 1
      %p365 = scmp.eq.s32.totalorder %s33, 1
      %p366 = scmp.ne.s32.totalorder %s361, %s363
      %p367 = scmp.eq.s32.totalorder %s33, 0
      %p368 = por %p366, %p367
      %p369 = scmp.ne.s32.totalorder %s361, %s363
      %p370 = scmp.eq.s32.totalorder %s38, 1
      %p371 = por %p369, %p370
      %p372 = scmp.ne.s32.totalorder %s363, %s364
      %p373 = scmp.eq.s32.totalorder %s38, 0
      %p374 = por %p372, %p373
      %p375 = scmp.ne.s32.totalorder %s363, %s364
      %p376 = scmp.eq.s32.totalorder %s39, 1
      %p377 = por %p375, %p376
      %p379 = scmp.ne.s32.totalorder %s364, %s378
      %p380 = scmp.eq.s32.totalorder %s39, 0
      %p381 = por %p379, %p380
      %s383 = sadd.s32 %s382, 1
      %p386 = scmp.eq.s32.totalorder %s33, 1
      %p387 = scmp.ne.s32.totalorder %s382, %s384
      %p388 = scmp.eq.s32.totalorder %s33, 0
      %p389 = por %p387, %p388
      %p390 = scmp.ne.s32.totalorder %s382, %s384
      %p391 = scmp.eq.s32.totalorder %s38, 1
      %p392 = por %p390, %p391
      %p393 = scmp.ne.s32.totalorder %s384, %s385
      %p394 = scmp.eq.s32.totalorder %s38, 0
      %p395 = por %p393, %p394
      %p396 = scmp.ne.s32.totalorder %s384, %s385
      %p397 = scmp.eq.s32.totalorder %s39, 1
      %p398 = por %p396, %p397
      %p400 = scmp.ne.s32.totalorder %s385, %s399
      %p401 = scmp.eq.s32.totalorder %s39, 0
      %p402 = por %p400, %p401
      %s403 = ssub.s32 %s33, %s40
      %p404 = scmp.eq.s32.totalorder %s403, 0
      %s406 = sadd.s32 %s405, 1
      %s407 = scalar_select %p404, %s405, %s406
      %p410 = pneg %p404
      %p411 = scmp.eq.s32.totalorder %s33, 1
      %p412 = por %p410, %p411
      %p413 = scmp.ne.s32.totalorder %s405, %s408
      %p414 = scmp.eq.s32.totalorder %s33, 0
      %p415 = por %p413, %p414
      %p416 = scmp.ne.s32.totalorder %s405, %s408
      %p417 = scmp.eq.s32.totalorder %s38, 1
      %p418 = por %p416, %p417
      %p419 = scmp.ne.s32.totalorder %s408, %s409
      %p420 = scmp.eq.s32.totalorder %s38, 0
      %p421 = por %p419, %p420
      %p422 = scmp.ne.s32.totalorder %s408, %s409
      %p423 = scmp.eq.s32.totalorder %s39, 1
      %p424 = por %p422, %p423
      %p426 = scmp.ne.s32.totalorder %s409, %s425
      %p427 = scmp.eq.s32.totalorder %s39, 0
      %p428 = por %p426, %p427
      %p429 = scmp.le.s32.totalorder 1, %s33
      %p430 = scmp.lt.s32.totalorder %s33, 3
      %p431 = pnand %p429, %p430
      %p432 = pneg %p431
      // Predicated region
      $region9: #{tpu_custom_call.1} parent=5 // pred_check
        _
      $region10: #{tpu_custom_call.1} parent=5 // pred_check_branch
        %434 = sbr.rel (%p431) target = $region12
      $region11: #{tpu_custom_call.1} parent=5 // pred_region
        %s435 = ssub.s32 %s33, 1
        // Predicated region
        $region13: #{tpu_custom_call.1} parent=11 // pred_check
          %p436 = pneg %p80
        $region14: #{tpu_custom_call.1} parent=11 // pred_check_branch
          %438 = sbr.rel (%p436) target = $region16
        $region15: #{tpu_custom_call.1} parent=11 // pred_region
          %440 = vsyncadd [#allocation6], 0
          %s441 = sshll.u32 %s1, 4
          %s442 = int_to_ptr.hbm [resolvable:$true] %s441
          %s443 = sshll.u32 [#allocation5], 4
          %s444 = int_to_ptr.vmem [resolvable:$true] %s443
          %449 = dma.hbm_to_vmem [thread:$0]  %s442, 10240, %s444, [#allocation6], 128, 128, 8
        $region16: #{tpu_custom_call.1} parent=11 // pred_fallthru
          _
        // Predicated region
        $region17: #{tpu_custom_call.1} parent=11 // pred_check
          %p450 = pneg %p101
        $region18: #{tpu_custom_call.1} parent=11 // pred_check_branch
          %452 = sbr.rel (%p450) target = $region20
        $region19: #{tpu_custom_call.1} parent=11 // pred_region
          _
        $region20: #{tpu_custom_call.1} parent=11 // pred_fallthru
          _
        // Predicated region
        $region21: #{tpu_custom_call.1} parent=11 // pred_check
          %p453 = pneg %p122
        $region22: #{tpu_custom_call.1} parent=11 // pred_check_branch
          %455 = sbr.rel (%p453) target = $region24
        $region23: #{tpu_custom_call.1} parent=11 // pred_region
          %457 = vsyncadd [#allocation6], 0
          %s458 = sshll.u32 %s3, 4
          %s459 = int_to_ptr.hbm [resolvable:$true] %s458
          %s460 = sshll.u32 [#allocation7], 4
          %s461 = int_to_ptr.vmem [resolvable:$true] %s460
          %466 = dma.hbm_to_vmem [thread:$0]  %s459, 10240, %s461, [#allocation6], 128, 128, 8
        $region24: #{tpu_custom_call.1} parent=11 // pred_fallthru
          _
        // Predicated region
        $region25: #{tpu_custom_call.1} parent=11 // pred_check
          %p467 = pneg %p143
        $region26: #{tpu_custom_call.1} parent=11 // pred_check_branch
          %469 = sbr.rel (%p467) target = $region28
        $region27: #{tpu_custom_call.1} parent=11 // pred_region
          _
        $region28: #{tpu_custom_call.1} parent=11 // pred_fallthru
          _
        // Predicated region
        $region29: #{tpu_custom_call.1} parent=11 // pred_check
          %p470 = pneg %p164
        $region30: #{tpu_custom_call.1} parent=11 // pred_check_branch
          %472 = sbr.rel (%p470) target = $region32
        $region31: #{tpu_custom_call.1} parent=11 // pred_region
          %474 = vsyncadd [#allocation9], 0
          %s475 = sshll.u32 %s5, 4
          %s476 = int_to_ptr.hbm [resolvable:$true] %s475
          %s477 = sshll.u32 [#allocation8], 4
          %s478 = int_to_ptr.vmem [resolvable:$true] %s477
          %483 = dma.hbm_to_vmem [thread:$0]  %s476, 2048, %s478, [#allocation9], 128, 128, 8
        $region32: #{tpu_custom_call.1} parent=11 // pred_fallthru
          _
        // Predicated region
        $region33: #{tpu_custom_call.1} parent=11 // pred_check
          %p484 = pneg %p185
        $region34: #{tpu_custom_call.1} parent=11 // pred_check_branch
          %486 = sbr.rel (%p484) target = $region36
        $region35: #{tpu_custom_call.1} parent=11 // pred_region
          _
        $region36: #{tpu_custom_call.1} parent=11 // pred_fallthru
          _
        // Predicated region
        $region37: #{tpu_custom_call.1} parent=11 // pred_check
          %p487 = pneg %p206
        $region38: #{tpu_custom_call.1} parent=11 // pred_check_branch
          %489 = sbr.rel (%p487) target = $region40
        $region39: #{tpu_custom_call.1} parent=11 // pred_region
          %491 = vsyncadd [#allocation9], 0
          %s492 = sshll.u32 %s7, 4
          %s493 = int_to_ptr.hbm [resolvable:$true] %s492
          %s494 = sshll.u32 [#allocation10], 4
          %s495 = int_to_ptr.vmem [resolvable:$true] %s494
          %500 = dma.hbm_to_vmem [thread:$0]  %s493, 10240, %s495, [#allocation9], 128, 128, 8
        $region40: #{tpu_custom_call.1} parent=11 // pred_fallthru
          _
        // Predicated region
        $region41: #{tpu_custom_call.1} parent=11 // pred_check
          %p501 = pneg %p227
        $region42: #{tpu_custom_call.1} parent=11 // pred_check_branch
          %503 = sbr.rel (%p501) target = $region44
        $region43: #{tpu_custom_call.1} parent=11 // pred_region
          _
        $region44: #{tpu_custom_call.1} parent=11 // pred_fallthru
          _
        // Predicated region
        $region45: #{tpu_custom_call.1} parent=11 // pred_check
          %p504 = pneg %p248
        $region46: #{tpu_custom_call.1} parent=11 // pred_check_branch
          %506 = sbr.rel (%p504) target = $region48
        $region47: #{tpu_custom_call.1} parent=11 // pred_region
          %508 = vsyncadd [#allocation12], 0
          %s509 = sshll.u32 %s9, 4
          %s510 = int_to_ptr.hbm [resolvable:$true] %s509
          %s511 = sshll.u32 [#allocation11], 4
          %s512 = int_to_ptr.vmem [resolvable:$true] %s511
          %517 = dma.hbm_to_vmem [thread:$0]  %s510, 10240, %s512, [#allocation12], 128, 128, 8
        $region48: #{tpu_custom_call.1} parent=11 // pred_fallthru
          _
        // Predicated region
        $region49: #{tpu_custom_call.1} parent=11 // pred_check
          %p518 = pneg %p269
        $region50: #{tpu_custom_call.1} parent=11 // pred_check_branch
          %520 = sbr.rel (%p518) target = $region52
        $region51: #{tpu_custom_call.1} parent=11 // pred_region
          _
        $region52: #{tpu_custom_call.1} parent=11 // pred_fallthru
          _
        // Predicated region
        $region53: #{tpu_custom_call.1} parent=11 // pred_check
          %p521 = pneg %p290
        $region54: #{tpu_custom_call.1} parent=11 // pred_check_branch
          %523 = sbr.rel (%p521) target = $region56
        $region55: #{tpu_custom_call.1} parent=11 // pred_region
          %525 = vsyncadd [#allocation12], 0
          %s526 = sshll.u32 %s11, 4
          %s527 = int_to_ptr.hbm [resolvable:$true] %s526
          %s528 = sshll.u32 [#allocation13], 4
          %s529 = int_to_ptr.vmem [resolvable:$true] %s528
          %534 = dma.hbm_to_vmem [thread:$0]  %s527, 2048, %s529, [#allocation12], 128, 128, 8
        $region56: #{tpu_custom_call.1} parent=11 // pred_fallthru
          _
        // Predicated region
        $region57: #{tpu_custom_call.1} parent=11 // pred_check
          %p535 = pneg %p311
        $region58: #{tpu_custom_call.1} parent=11 // pred_check_branch
          %537 = sbr.rel (%p535) target = $region60
        $region59: #{tpu_custom_call.1} parent=11 // pred_region
          _
        $region60: #{tpu_custom_call.1} parent=11 // pred_fallthru
          _
        // Predicated region
        $region61: #{tpu_custom_call.1} parent=11 // pred_check
          %p538 = pneg %p332
        $region62: #{tpu_custom_call.1} parent=11 // pred_check_branch
          %540 = sbr.rel (%p538) target = $region64
        $region63: #{tpu_custom_call.1} parent=11 // pred_region
          %542 = vsyncadd [#allocation15], 0
          %s543 = sshll.u32 %s13, 4
          %s544 = int_to_ptr.hbm [resolvable:$true] %s543
          %s545 = sshll.u32 [#allocation14], 4
          %s546 = int_to_ptr.vmem [resolvable:$true] %s545
          %551 = dma.hbm_to_vmem [thread:$0]  %s544, 10240, %s546, [#allocation15], 128, 128, 8
        $region64: #{tpu_custom_call.1} parent=11 // pred_fallthru
          _
        // Predicated region
        $region65: #{tpu_custom_call.1} parent=11 // pred_check
          %p552 = pneg %p353
        $region66: #{tpu_custom_call.1} parent=11 // pred_check_branch
          %554 = sbr.rel (%p552) target = $region68
        $region67: #{tpu_custom_call.1} parent=11 // pred_region
          _
        $region68: #{tpu_custom_call.1} parent=11 // pred_fallthru
          _
        // Predicated region
        $region69: #{tpu_custom_call.1} parent=11 // pred_check
          %p555 = pneg %p374
        $region70: #{tpu_custom_call.1} parent=11 // pred_check_branch
          %557 = sbr.rel (%p555) target = $region72
        $region71: #{tpu_custom_call.1} parent=11 // pred_region
          %559 = vsyncadd [#allocation15], 0
          %s560 = sshll.u32 %s15, 4
          %s561 = int_to_ptr.hbm [resolvable:$true] %s560
          %s562 = sshll.u32 [#allocation16], 4
          %s563 = int_to_ptr.vmem [resolvable:$true] %s562
          %568 = dma.hbm_to_vmem [thread:$0]  %s561, 10240, %s563, [#allocation15], 128, 128, 8
        $region72: #{tpu_custom_call.1} parent=11 // pred_fallthru
          _
        // Predicated region
        $region73: #{tpu_custom_call.1} parent=11 // pred_check
          %p569 = pneg %p395
        $region74: #{tpu_custom_call.1} parent=11 // pred_check_branch
          %571 = sbr.rel (%p569) target = $region76
        $region75: #{tpu_custom_call.1} parent=11 // pred_region
          _
        $region76: #{tpu_custom_call.1} parent=11 // pred_fallthru
          _
      $region12: #{tpu_custom_call.1} parent=5 // pred_fallthru
        _
      %p572 = scmp.lt.s32.totalorder %s33, 2
      // Predicated region
      $region77: #{tpu_custom_call.1} parent=5 // pred_check
        %p573 = pneg %p572
      $region78: #{tpu_custom_call.1} parent=5 // pred_check_branch
        %575 = sbr.rel (%p573) target = $region80
      $region79: #{tpu_custom_call.1} parent=5 // pred_region
        // Predicated region
        $region81: #{tpu_custom_call.1} parent=79 // pred_check
          %p576 = pneg %p53
        $region82: #{tpu_custom_call.1} parent=79 // pred_check_branch
          %578 = sbr.rel (%p576) target = $region84
        $region83: #{tpu_custom_call.1} parent=79 // pred_region
          %s579 = sand.u32 %s43, 1
          %s580 = scalar_lea.sflag [#allocation3], %s579
          %s581 = sand.u32 %s43, 1
          %s582 = smul.addr %s581, 16
          %s583 = scalar_lea.vmem [#allocation2], %s582
          %585 = vsyncadd %s580, 0
          %s586 = smul.addr %s33, 2
          %s587 = smul.addr %s586, 8
          %s588 = scalar_lea.hbm %s0, %s587
          %s589 = sshll.u32 %s588, 4
          %s590 = int_to_ptr.hbm [resolvable:$true] %s589
          %s591 = sshll.u32 %s583, 4
          %s592 = int_to_ptr.vmem [resolvable:$true] %s591
          %597 = dma.hbm_to_vmem [thread:$0]  %s590, 256, %s592, %s580, 128, 128, 8
        $region84: #{tpu_custom_call.1} parent=79 // pred_fallthru
          _
      $region80: #{tpu_custom_call.1} parent=5 // pred_fallthru
        _
      %p598 = scmp.le.s32.totalorder 1, %s33
      %p599 = scmp.lt.s32.totalorder %s33, 3
      %p600 = pnand %p598, %p599
      %p601 = pneg %p600
      // Predicated region
      $region85: #{tpu_custom_call.1} parent=5 // pred_check
        _
      $region86: #{tpu_custom_call.1} parent=5 // pred_check_branch
        %603 = sbr.rel (%p600) target = $region88
      $region87: #{tpu_custom_call.1} parent=5 // pred_region
        %s604 = ssub.s32 %s33, 1
        %s605 = sand.u32 %s46, 1
        %s606 = scalar_lea.sflag [#allocation3], %s605
        %s607 = sand.u32 %s46, 1
        %s608 = smul.addr %s607, 16
        %s609 = scalar_lea.vmem [#allocation2], %s608
        // Predicated region
        $region89: #{tpu_custom_call.1} parent=87 // pred_check
          %p610 = pneg %p59
        $region90: #{tpu_custom_call.1} parent=87 // pred_check_branch
          %612 = sbr.rel (%p610) target = $region92
        $region91: #{tpu_custom_call.1} parent=87 // pred_region
          %614 = dma.done %s606, 256
        $region92: #{tpu_custom_call.1} parent=87 // pred_fallthru
          _
        // Predicated region
        $region93: #{tpu_custom_call.1} parent=87 // pred_check
          %p615 = pneg %p80
        $region94: #{tpu_custom_call.1} parent=87 // pred_check_branch
          %617 = sbr.rel (%p615) target = $region96
        $region95: #{tpu_custom_call.1} parent=87 // pred_region
          %619 = dma.done [#allocation6], 10240
        $region96: #{tpu_custom_call.1} parent=87 // pred_fallthru
          _
        // Predicated region
        $region97: #{tpu_custom_call.1} parent=87 // pred_check
          %p620 = pneg %p122
        $region98: #{tpu_custom_call.1} parent=87 // pred_check_branch
          %622 = sbr.rel (%p620) target = $region100
        $region99: #{tpu_custom_call.1} parent=87 // pred_region
          %624 = dma.done [#allocation6], 10240
        $region100: #{tpu_custom_call.1} parent=87 // pred_fallthru
          _
        // Predicated region
        $region101: #{tpu_custom_call.1} parent=87 // pred_check
          %p625 = pneg %p164
        $region102: #{tpu_custom_call.1} parent=87 // pred_check_branch
          %627 = sbr.rel (%p625) target = $region104
        $region103: #{tpu_custom_call.1} parent=87 // pred_region
          %629 = dma.done [#allocation9], 2048
        $region104: #{tpu_custom_call.1} parent=87 // pred_fallthru
          _
        // Predicated region
        $region105: #{tpu_custom_call.1} parent=87 // pred_check
          %p630 = pneg %p206
        $region106: #{tpu_custom_call.1} parent=87 // pred_check_branch
          %632 = sbr.rel (%p630) target = $region108
        $region107: #{tpu_custom_call.1} parent=87 // pred_region
          %634 = dma.done [#allocation9], 10240
        $region108: #{tpu_custom_call.1} parent=87 // pred_fallthru
          _
        // Predicated region
        $region109: #{tpu_custom_call.1} parent=87 // pred_check
          %p635 = pneg %p248
        $region110: #{tpu_custom_call.1} parent=87 // pred_check_branch
          %637 = sbr.rel (%p635) target = $region112
        $region111: #{tpu_custom_call.1} parent=87 // pred_region
          %639 = dma.done [#allocation12], 10240
        $region112: #{tpu_custom_call.1} parent=87 // pred_fallthru
          _
        // Predicated region
        $region113: #{tpu_custom_call.1} parent=87 // pred_check
          %p640 = pneg %p290
        $region114: #{tpu_custom_call.1} parent=87 // pred_check_branch
          %642 = sbr.rel (%p640) target = $region116
        $region115: #{tpu_custom_call.1} parent=87 // pred_region
          %644 = dma.done [#allocation12], 2048
        $region116: #{tpu_custom_call.1} parent=87 // pred_fallthru
          _
        // Predicated region
        $region117: #{tpu_custom_call.1} parent=87 // pred_check
          %p645 = pneg %p332
        $region118: #{tpu_custom_call.1} parent=87 // pred_check_branch
          %647 = sbr.rel (%p645) target = $region120
        $region119: #{tpu_custom_call.1} parent=87 // pred_region
          %649 = dma.done [#allocation15], 10240
        $region120: #{tpu_custom_call.1} parent=87 // pred_fallthru
          _
        // Predicated region
        $region121: #{tpu_custom_call.1} parent=87 // pred_check
          %p650 = pneg %p374
        $region122: #{tpu_custom_call.1} parent=87 // pred_check_branch
          %652 = sbr.rel (%p650) target = $region124
        $region123: #{tpu_custom_call.1} parent=87 // pred_region
          %654 = dma.done [#allocation15], 10240
        $region124: #{tpu_custom_call.1} parent=87 // pred_fallthru
          _
        %s655 = sand.u32 %s46, 1
        %s656 = scalar_lea.sflag [#allocation3], %s655
        %s657 = sand.u32 %s46, 1
        %s658 = smul.addr %s657, 16
        %s659 = scalar_lea.vmem [#allocation2], %s658
        %p660 = pneg %p59
        %p661 = pneg %p56
        %p662 = pneg %p80
        %p663 = pneg %p77
        %p664 = pneg %p101
        %p665 = pneg %p98
        %p666 = pneg %p122
        %p667 = pneg %p119
        %p668 = pneg %p143
        %p669 = pneg %p140
        %p670 = pneg %p164
        %p671 = pneg %p161
        %p672 = pneg %p185
        %p673 = pneg %p182
        %p674 = pneg %p206
        %p675 = pneg %p203
        %p676 = pneg %p227
        %p677 = pneg %p224
        %p678 = pneg %p248
        %p679 = pneg %p245
        %p680 = pneg %p269
        %p681 = pneg %p266
        %p682 = pneg %p290
        %p683 = pneg %p287
        %p684 = pneg %p311
        %p685 = pneg %p308
        %p686 = pneg %p332
        %p687 = pneg %p329
        %p688 = pneg %p353
        %p689 = pneg %p350
        %p690 = pneg %p374
        %p691 = pneg %p371
        %p692 = pneg %p395
        %p693 = pneg %p392
        %p694 = pneg %p421
        %p695 = pneg %p418
        %s696 = sand.u32 %s408, 1
        %s697 = scalar_lea.sflag [#allocation4], %s696
        %s698 = sand.u32 %s408, 1
        %s699 = smul.addr %s698, 16
        %s700 = scalar_lea.vmem [#allocation17], %s699
        %v701 = vld [vmem:[%s609] sm:$0xff]
        %v702 = vld [vmem:[%s609 + $0x8] sm:$0xff]
        %vm705 = vcmask 1043456
        %v706 = vrot.slane %v701, 4
        %v707 = vrot.slane %v702, 4
        %v708 = vsel %vm705, %v706, %v707
        %v711 = vsel %vm705, 0.0, %v706
        %vm713 = vcmask 1046528
        %v714 = vrot.slane %v711, 1
        %v715 = vrot.slane %v708, 1
        %v716 = vsel %vm713, %v714, %v715
        %v717 = vrot.slane %v707, 1
        %v718 = vsel %vm713, %v715, %v717
        %vm721 = vcmask 1045504
        %v722 = vrot.slane %v711, 2
        %v723 = vrot.slane %v708, 2
        %v724 = vsel %vm721, %v722, %v723
        %v725 = vrot.slane %v707, 2
        %v726 = vsel %vm721, %v723, %v725
        %vm729 = vcmask 1044480
        %v730 = vrot.slane %v711, 3
        %v731 = vrot.slane %v708, 3
        %v732 = vsel %vm729, %v730, %v731
        %v733 = vrot.slane %v707, 3
        %v734 = vsel %vm729, %v731, %v733
        %v737 = vrot.slane %v711, 4
        %v738 = vrot.slane %v708, 4
        %v739 = vsel %vm705, %v737, %v738
        %v740 = vrot.slane %v707, 4
        %v741 = vsel %vm705, %v738, %v740
        %v744 = vld [vmem:[#allocation5] sm:$0xff]
        %v745 = vld [vmem:[#allocation5 + $0x8] sm:$0xff]
        %v746 = vld [vmem:[#allocation5 + $0x10] sm:$0xff]
        %v747 = vld [vmem:[#allocation5 + $0x18] sm:$0xff]
        %v748 = vld [vmem:[#allocation5 + $0x20] sm:$0xff]
        %v749 = vld [vmem:[#allocation5 + $0x28] sm:$0xff]
        %v750 = vld [vmem:[#allocation5 + $0x30] sm:$0xff]
        %v751 = vld [vmem:[#allocation5 + $0x38] sm:$0xff]
        %v752 = vld [vmem:[#allocation5 + $0x40] sm:$0xff]
        %v753 = vld [vmem:[#allocation5 + $0x48] sm:$0xff]
        %v754 = vld [vmem:[#allocation5 + $0x50] sm:$0xff]
        %v755 = vld [vmem:[#allocation5 + $0x58] sm:$0xff]
        %v756 = vld [vmem:[#allocation5 + $0x60] sm:$0xff]
        %v757 = vld [vmem:[#allocation5 + $0x68] sm:$0xff]
        %v758 = vld [vmem:[#allocation5 + $0x70] sm:$0xff]
        %v759 = vld [vmem:[#allocation5 + $0x78] sm:$0xff]
        %v760 = vld [vmem:[#allocation5 + $0x80] sm:$0xff]
        %v761 = vld [vmem:[#allocation5 + $0x88] sm:$0xff]
        %v762 = vld [vmem:[#allocation5 + $0x90] sm:$0xff]
        %v763 = vld [vmem:[#allocation5 + $0x98] sm:$0xff]
        %v764 = vld [vmem:[#allocation5 + $0xa0] sm:$0xff]
        %v765 = vld [vmem:[#allocation5 + $0xa8] sm:$0xff]
        %v766 = vld [vmem:[#allocation5 + $0xb0] sm:$0xff]
        %v767 = vld [vmem:[#allocation5 + $0xb8] sm:$0xff]
        %v768 = vld [vmem:[#allocation5 + $0xc0] sm:$0xff]
        %v769 = vld [vmem:[#allocation5 + $0xc8] sm:$0xff]
        %v770 = vld [vmem:[#allocation5 + $0xd0] sm:$0xff]
        %v771 = vld [vmem:[#allocation5 + $0xd8] sm:$0xff]
        %v772 = vld [vmem:[#allocation5 + $0xe0] sm:$0xff]
        %v773 = vld [vmem:[#allocation5 + $0xe8] sm:$0xff]
        %v774 = vld [vmem:[#allocation5 + $0xf0] sm:$0xff]
        %v775 = vld [vmem:[#allocation5 + $0xf8] sm:$0xff]
        %v776 = vld [vmem:[#allocation5 + $0x100] sm:$0xff]
        %v777 = vld [vmem:[#allocation5 + $0x108] sm:$0xff]
        %v778 = vld [vmem:[#allocation5 + $0x110] sm:$0xff]
        %v779 = vld [vmem:[#allocation5 + $0x118] sm:$0xff]
        %v780 = vld [vmem:[#allocation5 + $0x120] sm:$0xff]
        %v781 = vld [vmem:[#allocation5 + $0x128] sm:$0xff]
        %v782 = vld [vmem:[#allocation5 + $0x130] sm:$0xff]
        %v783 = vld [vmem:[#allocation5 + $0x138] sm:$0xff]
        %v784 = vld [vmem:[#allocation5 + $0x140] sm:$0xff]
        %v785 = vld [vmem:[#allocation5 + $0x148] sm:$0xff]
        %v786 = vld [vmem:[#allocation5 + $0x150] sm:$0xff]
        %v787 = vld [vmem:[#allocation5 + $0x158] sm:$0xff]
        %v788 = vld [vmem:[#allocation5 + $0x160] sm:$0xff]
        %v789 = vld [vmem:[#allocation5 + $0x168] sm:$0xff]
        %v790 = vld [vmem:[#allocation5 + $0x170] sm:$0xff]
        %v791 = vld [vmem:[#allocation5 + $0x178] sm:$0xff]
        %v792 = vld [vmem:[#allocation5 + $0x180] sm:$0xff]
        %v793 = vld [vmem:[#allocation5 + $0x188] sm:$0xff]
        %v794 = vld [vmem:[#allocation5 + $0x190] sm:$0xff]
        %v795 = vld [vmem:[#allocation5 + $0x198] sm:$0xff]
        %v796 = vld [vmem:[#allocation5 + $0x1a0] sm:$0xff]
        %v797 = vld [vmem:[#allocation5 + $0x1a8] sm:$0xff]
        %v798 = vld [vmem:[#allocation5 + $0x1b0] sm:$0xff]
        %v799 = vld [vmem:[#allocation5 + $0x1b8] sm:$0xff]
        %v800 = vld [vmem:[#allocation5 + $0x1c0] sm:$0xff]
        %v801 = vld [vmem:[#allocation5 + $0x1c8] sm:$0xff]
        %v802 = vld [vmem:[#allocation5 + $0x1d0] sm:$0xff]
        %v803 = vld [vmem:[#allocation5 + $0x1d8] sm:$0xff]
        %v804 = vld [vmem:[#allocation5 + $0x1e0] sm:$0xff]
        %v805 = vld [vmem:[#allocation5 + $0x1e8] sm:$0xff]
        %v806 = vld [vmem:[#allocation5 + $0x1f0] sm:$0xff]
        %v807 = vld [vmem:[#allocation5 + $0x1f8] sm:$0xff]
        %v808 = vld [vmem:[#allocation5 + $0x200] sm:$0xff]
        %v809 = vld [vmem:[#allocation5 + $0x208] sm:$0xff]
        %v810 = vld [vmem:[#allocation5 + $0x210] sm:$0xff]
        %v811 = vld [vmem:[#allocation5 + $0x218] sm:$0xff]
        %v812 = vld [vmem:[#allocation5 + $0x220] sm:$0xff]
        %v813 = vld [vmem:[#allocation5 + $0x228] sm:$0xff]
        %v814 = vld [vmem:[#allocation5 + $0x230] sm:$0xff]
        %v815 = vld [vmem:[#allocation5 + $0x238] sm:$0xff]
        %v816 = vld [vmem:[#allocation5 + $0x240] sm:$0xff]
        %v817 = vld [vmem:[#allocation5 + $0x248] sm:$0xff]
        %v818 = vld [vmem:[#allocation5 + $0x250] sm:$0xff]
        %v819 = vld [vmem:[#allocation5 + $0x258] sm:$0xff]
        %v820 = vld [vmem:[#allocation5 + $0x260] sm:$0xff]
        %v821 = vld [vmem:[#allocation5 + $0x268] sm:$0xff]
        %v822 = vld [vmem:[#allocation5 + $0x270] sm:$0xff]
        %v823 = vld [vmem:[#allocation5 + $0x278] sm:$0xff]
        %v824 = vld [vmem:[%s2] sm:$0x1]
        %v826 = vperm.slane %v824, 0
        %828 = vmatpush.msra.mxu0 %v759
        %829 = vmatpush.msra.mxu0 %v758
        %830 = vmatpush.msra.mxu0 %v757
        %831 = vmatpush.msra.mxu0 %v756
        %832 = vmatpush.msra.mxu0 %v755
        %833 = vmatpush.msra.mxu0 %v754
        %834 = vmatpush.msra.mxu0 %v753
        %835 = vmatpush.msra.mxu0 %v752
        %836 = vmatpush.msra.mxu0 %v751
        %837 = vmatpush.msra.mxu0 %v750
        %838 = vmatpush.msra.mxu0 %v749
        %839 = vmatpush.msra.mxu0 %v748
        %840 = vmatpush.msra.mxu0 %v747
        %841 = vmatpush.msra.mxu0 %v746
        %842 = vmatpush.msra.mxu0 %v745
        %843 = vmatpush.msra.mxu0 %v744
        %844 = vmatmul.f32.gmra.mxu0 %v711
        %v845 = vpop.f32.mrf.mxu0
        %v846 = vadd.f32 %v826, %v845
        %847 = vmatmul.f32.gmra.mxu0 %v708
        %v848 = vpop.f32.mrf.mxu0
        %v849 = vadd.f32 %v826, %v848
        %850 = vdwg.mxu0
        %851 = vmatpush.msra.mxu0 %v775
        %852 = vmatpush.msra.mxu0 %v774
        %853 = vmatpush.msra.mxu0 %v773
        %854 = vmatpush.msra.mxu0 %v772
        %855 = vmatpush.msra.mxu0 %v771
        %856 = vmatpush.msra.mxu0 %v770
        %857 = vmatpush.msra.mxu0 %v769
        %858 = vmatpush.msra.mxu0 %v768
        %859 = vmatpush.msra.mxu0 %v767
        %860 = vmatpush.msra.mxu0 %v766
        %861 = vmatpush.msra.mxu0 %v765
        %862 = vmatpush.msra.mxu0 %v764
        %863 = vmatpush.msra.mxu0 %v763
        %864 = vmatpush.msra.mxu0 %v762
        %865 = vmatpush.msra.mxu0 %v761
        %866 = vmatpush.msra.mxu0 %v760
        %867 = vmatmul.f32.gmra.mxu0 %v716
        %v868 = vpop.f32.mrf.mxu0
        %v869 = vadd.f32 %v846, %v868
        %870 = vmatmul.f32.gmra.mxu0 %v718
        %v871 = vpop.f32.mrf.mxu0
        %v872 = vadd.f32 %v849, %v871
        %873 = vdwg.mxu0
        %874 = vmatpush.msra.mxu0 %v791
        %875 = vmatpush.msra.mxu0 %v790
        %876 = vmatpush.msra.mxu0 %v789
        %877 = vmatpush.msra.mxu0 %v788
        %878 = vmatpush.msra.mxu0 %v787
        %879 = vmatpush.msra.mxu0 %v786
        %880 = vmatpush.msra.mxu0 %v785
        %881 = vmatpush.msra.mxu0 %v784
        %882 = vmatpush.msra.mxu0 %v783
        %883 = vmatpush.msra.mxu0 %v782
        %884 = vmatpush.msra.mxu0 %v781
        %885 = vmatpush.msra.mxu0 %v780
        %886 = vmatpush.msra.mxu0 %v779
        %887 = vmatpush.msra.mxu0 %v778
        %888 = vmatpush.msra.mxu0 %v777
        %889 = vmatpush.msra.mxu0 %v776
        %890 = vmatmul.f32.gmra.mxu0 %v724
        %v891 = vpop.f32.mrf.mxu0
        %v892 = vadd.f32 %v869, %v891
        %893 = vmatmul.f32.gmra.mxu0 %v726
        %v894 = vpop.f32.mrf.mxu0
        %v895 = vadd.f32 %v872, %v894
        %896 = vdwg.mxu0
        %897 = vmatpush.msra.mxu0 %v807
        %898 = vmatpush.msra.mxu0 %v806
        %899 = vmatpush.msra.mxu0 %v805
        %900 = vmatpush.msra.mxu0 %v804
        %901 = vmatpush.msra.mxu0 %v803
        %902 = vmatpush.msra.mxu0 %v802
        %903 = vmatpush.msra.mxu0 %v801
        %904 = vmatpush.msra.mxu0 %v800
        %905 = vmatpush.msra.mxu0 %v799
        %906 = vmatpush.msra.mxu0 %v798
        %907 = vmatpush.msra.mxu0 %v797
        %908 = vmatpush.msra.mxu0 %v796
        %909 = vmatpush.msra.mxu0 %v795
        %910 = vmatpush.msra.mxu0 %v794
        %911 = vmatpush.msra.mxu0 %v793
        %912 = vmatpush.msra.mxu0 %v792
        %913 = vmatmul.f32.gmra.mxu0 %v732
        %v914 = vpop.f32.mrf.mxu0
        %v915 = vadd.f32 %v892, %v914
        %916 = vmatmul.f32.gmra.mxu0 %v734
        %v917 = vpop.f32.mrf.mxu0
        %v918 = vadd.f32 %v895, %v917
        %919 = vdwg.mxu0
        %920 = vmatpush.msra.mxu0 %v823
        %921 = vmatpush.msra.mxu0 %v822
        %922 = vmatpush.msra.mxu0 %v821
        %923 = vmatpush.msra.mxu0 %v820
        %924 = vmatpush.msra.mxu0 %v819
        %925 = vmatpush.msra.mxu0 %v818
        %926 = vmatpush.msra.mxu0 %v817
        %927 = vmatpush.msra.mxu0 %v816
        %928 = vmatpush.msra.mxu0 %v815
        %929 = vmatpush.msra.mxu0 %v814
        %930 = vmatpush.msra.mxu0 %v813
        %931 = vmatpush.msra.mxu0 %v812
        %932 = vmatpush.msra.mxu0 %v811
        %933 = vmatpush.msra.mxu0 %v810
        %934 = vmatpush.msra.mxu0 %v809
        %935 = vmatpush.msra.mxu0 %v808
        %936 = vmatmul.f32.gmra.mxu0 %v739
        %v937 = vpop.f32.mrf.mxu0
        %v938 = vadd.f32 %v915, %v937
        %939 = vmatmul.f32.gmra.mxu0 %v741
        %v940 = vpop.f32.mrf.mxu0
        %v941 = vadd.f32 %v918, %v940
        %942 = vdwg.mxu0
        %v943 = vmax.f32 %v938, 0.0
        %v944 = vmax.f32 %v941, 0.0
        %v947 = vrot.slane %v943, 4
        %v948 = vrot.slane %v944, 4
        %v949 = vsel %vm705, %v947, %v948
        %v952 = vsel %vm705, 0.0, %v947
        %v954 = vrot.slane %v952, 1
        %v955 = vrot.slane %v949, 1
        %v956 = vsel %vm713, %v954, %v955
        %v957 = vrot.slane %v948, 1
        %v958 = vsel %vm713, %v955, %v957
        %v961 = vrot.slane %v952, 2
        %v962 = vrot.slane %v949, 2
        %v963 = vsel %vm721, %v961, %v962
        %v964 = vrot.slane %v948, 2
        %v965 = vsel %vm721, %v962, %v964
        %v968 = vrot.slane %v952, 3
        %v969 = vrot.slane %v949, 3
        %v970 = vsel %vm729, %v968, %v969
        %v971 = vrot.slane %v948, 3
        %v972 = vsel %vm729, %v969, %v971
        %v975 = vrot.slane %v952, 4
        %v976 = vrot.slane %v949, 4
        %v977 = vsel %vm705, %v975, %v976
        %v978 = vrot.slane %v948, 4
        %v979 = vsel %vm705, %v976, %v978
        %v982 = vld [vmem:[#allocation7] sm:$0xff]
        %v983 = vld [vmem:[#allocation7 + $0x8] sm:$0xff]
        %v984 = vld [vmem:[#allocation7 + $0x10] sm:$0xff]
        %v985 = vld [vmem:[#allocation7 + $0x18] sm:$0xff]
        %v986 = vld [vmem:[#allocation7 + $0x20] sm:$0xff]
        %v987 = vld [vmem:[#allocation7 + $0x28] sm:$0xff]
        %v988 = vld [vmem:[#allocation7 + $0x30] sm:$0xff]
        %v989 = vld [vmem:[#allocation7 + $0x38] sm:$0xff]
        %v990 = vld [vmem:[#allocation7 + $0x40] sm:$0xff]
        %v991 = vld [vmem:[#allocation7 + $0x48] sm:$0xff]
        %v992 = vld [vmem:[#allocation7 + $0x50] sm:$0xff]
        %v993 = vld [vmem:[#allocation7 + $0x58] sm:$0xff]
        %v994 = vld [vmem:[#allocation7 + $0x60] sm:$0xff]
        %v995 = vld [vmem:[#allocation7 + $0x68] sm:$0xff]
        %v996 = vld [vmem:[#allocation7 + $0x70] sm:$0xff]
        %v997 = vld [vmem:[#allocation7 + $0x78] sm:$0xff]
        %v998 = vld [vmem:[#allocation7 + $0x80] sm:$0xff]
        %v999 = vld [vmem:[#allocation7 + $0x88] sm:$0xff]
        %v1000 = vld [vmem:[#allocation7 + $0x90] sm:$0xff]
        %v1001 = vld [vmem:[#allocation7 + $0x98] sm:$0xff]
        %v1002 = vld [vmem:[#allocation7 + $0xa0] sm:$0xff]
        %v1003 = vld [vmem:[#allocation7 + $0xa8] sm:$0xff]
        %v1004 = vld [vmem:[#allocation7 + $0xb0] sm:$0xff]
        %v1005 = vld [vmem:[#allocation7 + $0xb8] sm:$0xff]
        %v1006 = vld [vmem:[#allocation7 + $0xc0] sm:$0xff]
        %v1007 = vld [vmem:[#allocation7 + $0xc8] sm:$0xff]
        %v1008 = vld [vmem:[#allocation7 + $0xd0] sm:$0xff]
        %v1009 = vld [vmem:[#allocation7 + $0xd8] sm:$0xff]
        %v1010 = vld [vmem:[#allocation7 + $0xe0] sm:$0xff]
        %v1011 = vld [vmem:[#allocation7 + $0xe8] sm:$0xff]
        %v1012 = vld [vmem:[#allocation7 + $0xf0] sm:$0xff]
        %v1013 = vld [vmem:[#allocation7 + $0xf8] sm:$0xff]
        %v1014 = vld [vmem:[#allocation7 + $0x100] sm:$0xff]
        %v1015 = vld [vmem:[#allocation7 + $0x108] sm:$0xff]
        %v1016 = vld [vmem:[#allocation7 + $0x110] sm:$0xff]
        %v1017 = vld [vmem:[#allocation7 + $0x118] sm:$0xff]
        %v1018 = vld [vmem:[#allocation7 + $0x120] sm:$0xff]
        %v1019 = vld [vmem:[#allocation7 + $0x128] sm:$0xff]
        %v1020 = vld [vmem:[#allocation7 + $0x130] sm:$0xff]
        %v1021 = vld [vmem:[#allocation7 + $0x138] sm:$0xff]
        %v1022 = vld [vmem:[#allocation7 + $0x140] sm:$0xff]
        %v1023 = vld [vmem:[#allocation7 + $0x148] sm:$0xff]
        %v1024 = vld [vmem:[#allocation7 + $0x150] sm:$0xff]
        %v1025 = vld [vmem:[#allocation7 + $0x158] sm:$0xff]
        %v1026 = vld [vmem:[#allocation7 + $0x160] sm:$0xff]
        %v1027 = vld [vmem:[#allocation7 + $0x168] sm:$0xff]
        %v1028 = vld [vmem:[#allocation7 + $0x170] sm:$0xff]
        %v1029 = vld [vmem:[#allocation7 + $0x178] sm:$0xff]
        %v1030 = vld [vmem:[#allocation7 + $0x180] sm:$0xff]
        %v1031 = vld [vmem:[#allocation7 + $0x188] sm:$0xff]
        %v1032 = vld [vmem:[#allocation7 + $0x190] sm:$0xff]
        %v1033 = vld [vmem:[#allocation7 + $0x198] sm:$0xff]
        %v1034 = vld [vmem:[#allocation7 + $0x1a0] sm:$0xff]
        %v1035 = vld [vmem:[#allocation7 + $0x1a8] sm:$0xff]
        %v1036 = vld [vmem:[#allocation7 + $0x1b0] sm:$0xff]
        %v1037 = vld [vmem:[#allocation7 + $0x1b8] sm:$0xff]
        %v1038 = vld [vmem:[#allocation7 + $0x1c0] sm:$0xff]
        %v1039 = vld [vmem:[#allocation7 + $0x1c8] sm:$0xff]
        %v1040 = vld [vmem:[#allocation7 + $0x1d0] sm:$0xff]
        %v1041 = vld [vmem:[#allocation7 + $0x1d8] sm:$0xff]
        %v1042 = vld [vmem:[#allocation7 + $0x1e0] sm:$0xff]
        %v1043 = vld [vmem:[#allocation7 + $0x1e8] sm:$0xff]
        %v1044 = vld [vmem:[#allocation7 + $0x1f0] sm:$0xff]
        %v1045 = vld [vmem:[#allocation7 + $0x1f8] sm:$0xff]
        %v1046 = vld [vmem:[#allocation7 + $0x200] sm:$0xff]
        %v1047 = vld [vmem:[#allocation7 + $0x208] sm:$0xff]
        %v1048 = vld [vmem:[#allocation7 + $0x210] sm:$0xff]
        %v1049 = vld [vmem:[#allocation7 + $0x218] sm:$0xff]
        %v1050 = vld [vmem:[#allocation7 + $0x220] sm:$0xff]
        %v1051 = vld [vmem:[#allocation7 + $0x228] sm:$0xff]
        %v1052 = vld [vmem:[#allocation7 + $0x230] sm:$0xff]
        %v1053 = vld [vmem:[#allocation7 + $0x238] sm:$0xff]
        %v1054 = vld [vmem:[#allocation7 + $0x240] sm:$0xff]
        %v1055 = vld [vmem:[#allocation7 + $0x248] sm:$0xff]
        %v1056 = vld [vmem:[#allocation7 + $0x250] sm:$0xff]
        %v1057 = vld [vmem:[#allocation7 + $0x258] sm:$0xff]
        %v1058 = vld [vmem:[#allocation7 + $0x260] sm:$0xff]
        %v1059 = vld [vmem:[#allocation7 + $0x268] sm:$0xff]
        %v1060 = vld [vmem:[#allocation7 + $0x270] sm:$0xff]
        %v1061 = vld [vmem:[#allocation7 + $0x278] sm:$0xff]
        %v1062 = vld [vmem:[%s4] sm:$0x1]
        %v1064 = vperm.slane %v1062, 0
        %1066 = vmatpush.msra.mxu0 %v997
        %1067 = vmatpush.msra.mxu0 %v996
        %1068 = vmatpush.msra.mxu0 %v995
        %1069 = vmatpush.msra.mxu0 %v994
        %1070 = vmatpush.msra.mxu0 %v993
        %1071 = vmatpush.msra.mxu0 %v992
        %1072 = vmatpush.msra.mxu0 %v991
        %1073 = vmatpush.msra.mxu0 %v990
        %1074 = vmatpush.msra.mxu0 %v989
        %1075 = vmatpush.msra.mxu0 %v988
        %1076 = vmatpush.msra.mxu0 %v987
        %1077 = vmatpush.msra.mxu0 %v986
        %1078 = vmatpush.msra.mxu0 %v985
        %1079 = vmatpush.msra.mxu0 %v984
        %1080 = vmatpush.msra.mxu0 %v983
        %1081 = vmatpush.msra.mxu0 %v982
        %1082 = vmatmul.f32.gmra.mxu0 %v952
        %v1083 = vpop.f32.mrf.mxu0
        %v1084 = vadd.f32 %v1064, %v1083
        %1085 = vmatmul.f32.gmra.mxu0 %v949
        %v1086 = vpop.f32.mrf.mxu0
        %v1087 = vadd.f32 %v1064, %v1086
        %1088 = vdwg.mxu0
        %1089 = vmatpush.msra.mxu0 %v1013
        %1090 = vmatpush.msra.mxu0 %v1012
        %1091 = vmatpush.msra.mxu0 %v1011
        %1092 = vmatpush.msra.mxu0 %v1010
        %1093 = vmatpush.msra.mxu0 %v1009
        %1094 = vmatpush.msra.mxu0 %v1008
        %1095 = vmatpush.msra.mxu0 %v1007
        %1096 = vmatpush.msra.mxu0 %v1006
        %1097 = vmatpush.msra.mxu0 %v1005
        %1098 = vmatpush.msra.mxu0 %v1004
        %1099 = vmatpush.msra.mxu0 %v1003
        %1100 = vmatpush.msra.mxu0 %v1002
        %1101 = vmatpush.msra.mxu0 %v1001
        %1102 = vmatpush.msra.mxu0 %v1000
        %1103 = vmatpush.msra.mxu0 %v999
        %1104 = vmatpush.msra.mxu0 %v998
        %1105 = vmatmul.f32.gmra.mxu0 %v956
        %v1106 = vpop.f32.mrf.mxu0
        %v1107 = vadd.f32 %v1084, %v1106
        %1108 = vmatmul.f32.gmra.mxu0 %v958
        %v1109 = vpop.f32.mrf.mxu0
        %v1110 = vadd.f32 %v1087, %v1109
        %1111 = vdwg.mxu0
        %1112 = vmatpush.msra.mxu0 %v1029
        %1113 = vmatpush.msra.mxu0 %v1028
        %1114 = vmatpush.msra.mxu0 %v1027
        %1115 = vmatpush.msra.mxu0 %v1026
        %1116 = vmatpush.msra.mxu0 %v1025
        %1117 = vmatpush.msra.mxu0 %v1024
        %1118 = vmatpush.msra.mxu0 %v1023
        %1119 = vmatpush.msra.mxu0 %v1022
        %1120 = vmatpush.msra.mxu0 %v1021
        %1121 = vmatpush.msra.mxu0 %v1020
        %1122 = vmatpush.msra.mxu0 %v1019
        %1123 = vmatpush.msra.mxu0 %v1018
        %1124 = vmatpush.msra.mxu0 %v1017
        %1125 = vmatpush.msra.mxu0 %v1016
        %1126 = vmatpush.msra.mxu0 %v1015
        %1127 = vmatpush.msra.mxu0 %v1014
        %1128 = vmatmul.f32.gmra.mxu0 %v963
        %v1129 = vpop.f32.mrf.mxu0
        %v1130 = vadd.f32 %v1107, %v1129
        %1131 = vmatmul.f32.gmra.mxu0 %v965
        %v1132 = vpop.f32.mrf.mxu0
        %v1133 = vadd.f32 %v1110, %v1132
        %1134 = vdwg.mxu0
        %1135 = vmatpush.msra.mxu0 %v1045
        %1136 = vmatpush.msra.mxu0 %v1044
        %1137 = vmatpush.msra.mxu0 %v1043
        %1138 = vmatpush.msra.mxu0 %v1042
        %1139 = vmatpush.msra.mxu0 %v1041
        %1140 = vmatpush.msra.mxu0 %v1040
        %1141 = vmatpush.msra.mxu0 %v1039
        %1142 = vmatpush.msra.mxu0 %v1038
        %1143 = vmatpush.msra.mxu0 %v1037
        %1144 = vmatpush.msra.mxu0 %v1036
        %1145 = vmatpush.msra.mxu0 %v1035
        %1146 = vmatpush.msra.mxu0 %v1034
        %1147 = vmatpush.msra.mxu0 %v1033
        %1148 = vmatpush.msra.mxu0 %v1032
        %1149 = vmatpush.msra.mxu0 %v1031
        %1150 = vmatpush.msra.mxu0 %v1030
        %1151 = vmatmul.f32.gmra.mxu0 %v970
        %v1152 = vpop.f32.mrf.mxu0
        %v1153 = vadd.f32 %v1130, %v1152
        %1154 = vmatmul.f32.gmra.mxu0 %v972
        %v1155 = vpop.f32.mrf.mxu0
        %v1156 = vadd.f32 %v1133, %v1155
        %1157 = vdwg.mxu0
        %1158 = vmatpush.msra.mxu0 %v1061
        %1159 = vmatpush.msra.mxu0 %v1060
        %1160 = vmatpush.msra.mxu0 %v1059
        %1161 = vmatpush.msra.mxu0 %v1058
        %1162 = vmatpush.msra.mxu0 %v1057
        %1163 = vmatpush.msra.mxu0 %v1056
        %1164 = vmatpush.msra.mxu0 %v1055
        %1165 = vmatpush.msra.mxu0 %v1054
        %1166 = vmatpush.msra.mxu0 %v1053
        %1167 = vmatpush.msra.mxu0 %v1052
        %1168 = vmatpush.msra.mxu0 %v1051
        %1169 = vmatpush.msra.mxu0 %v1050
        %1170 = vmatpush.msra.mxu0 %v1049
        %1171 = vmatpush.msra.mxu0 %v1048
        %1172 = vmatpush.msra.mxu0 %v1047
        %1173 = vmatpush.msra.mxu0 %v1046
        %1174 = vmatmul.f32.gmra.mxu0 %v977
        %v1175 = vpop.f32.mrf.mxu0
        %v1176 = vadd.f32 %v1153, %v1175
        %1177 = vmatmul.f32.gmra.mxu0 %v979
        %v1178 = vpop.f32.mrf.mxu0
        %v1179 = vadd.f32 %v1156, %v1178
        %1180 = vdwg.mxu0
        %v1181 = vmax.f32 %v1176, 0.0
        %v1182 = vmax.f32 %v1179, 0.0
        %v1183 = vld [vmem:[#allocation8] sm:$0xff]
        %v1184 = vld [vmem:[#allocation8 + $0x8] sm:$0xff]
        %v1185 = vld [vmem:[#allocation8 + $0x10] sm:$0xff]
        %v1186 = vld [vmem:[#allocation8 + $0x18] sm:$0xff]
        %v1187 = vld [vmem:[#allocation8 + $0x20] sm:$0xff]
        %v1188 = vld [vmem:[#allocation8 + $0x28] sm:$0xff]
        %v1189 = vld [vmem:[#allocation8 + $0x30] sm:$0xff]
        %v1190 = vld [vmem:[#allocation8 + $0x38] sm:$0xff]
        %v1191 = vld [vmem:[#allocation8 + $0x40] sm:$0xff]
        %v1192 = vld [vmem:[#allocation8 + $0x48] sm:$0xff]
        %v1193 = vld [vmem:[#allocation8 + $0x50] sm:$0xff]
        %v1194 = vld [vmem:[#allocation8 + $0x58] sm:$0xff]
        %v1195 = vld [vmem:[#allocation8 + $0x60] sm:$0xff]
        %v1196 = vld [vmem:[#allocation8 + $0x68] sm:$0xff]
        %v1197 = vld [vmem:[#allocation8 + $0x70] sm:$0xff]
        %v1198 = vld [vmem:[#allocation8 + $0x78] sm:$0xff]
        %v1199 = vld [vmem:[%s6] sm:$0x1]
        %v1201 = vperm.slane %v1199, 0
        %1203 = vmatpush.msra.mxu0 %v1198
        %1204 = vmatpush.msra.mxu0 %v1197
        %1205 = vmatpush.msra.mxu0 %v1196
        %1206 = vmatpush.msra.mxu0 %v1195
        %1207 = vmatpush.msra.mxu0 %v1194
        %1208 = vmatpush.msra.mxu0 %v1193
        %1209 = vmatpush.msra.mxu0 %v1192
        %1210 = vmatpush.msra.mxu0 %v1191
        %1211 = vmatpush.msra.mxu0 %v1190
        %1212 = vmatpush.msra.mxu0 %v1189
        %1213 = vmatpush.msra.mxu0 %v1188
        %1214 = vmatpush.msra.mxu0 %v1187
        %1215 = vmatpush.msra.mxu0 %v1186
        %1216 = vmatpush.msra.mxu0 %v1185
        %1217 = vmatpush.msra.mxu0 %v1184
        %1218 = vmatpush.msra.mxu0 %v1183
        %1219 = vmatmul.f32.gmra.mxu0 %v701
        %v1220 = vpop.f32.mrf.mxu0
        %v1221 = vadd.f32 %v1201, %v1220
        %1222 = vmatmul.f32.gmra.mxu0 %v702
        %v1223 = vpop.f32.mrf.mxu0
        %v1224 = vadd.f32 %v1201, %v1223
        %1225 = vdwg.mxu0
        %v1226 = vadd.f32 %v1181, %v1221
        %v1227 = vadd.f32 %v1182, %v1224
        %v1228 = vmax.f32 %v1226, 0.0
        %v1229 = vmax.f32 %v1227, 0.0
        %v1233 = vrot.slane 0.0, 2
        %v1234 = vrot.slane %v1228, 2
        %v1235 = vsel %vm721, %v1233, %v1234
        %v1236 = vrot.slane %v1229, 2
        %v1237 = vsel %vm721, %v1234, %v1236
        %v1240 = vrot.slane 0.0, 4
        %v1241 = vrot.slane %v1228, 4
        %v1242 = vsel %vm705, %v1240, %v1241
        %v1243 = vrot.slane %v1229, 4
        %v1244 = vsel %vm705, %v1241, %v1243
        %vm1247 = vcmask 1041408
        %v1248 = vrot.slane 0.0, 6
        %v1249 = vrot.slane %v1228, 6
        %v1250 = vsel %vm1247, %v1248, %v1249
        %v1251 = vrot.slane %v1229, 6
        %v1252 = vsel %vm1247, %v1249, %v1251
        %v1255 = vld [vmem:[#allocation10] sm:$0xff]
        %v1256 = vld [vmem:[#allocation10 + $0x8] sm:$0xff]
        %v1257 = vld [vmem:[#allocation10 + $0x10] sm:$0xff]
        %v1258 = vld [vmem:[#allocation10 + $0x18] sm:$0xff]
        %v1259 = vld [vmem:[#allocation10 + $0x20] sm:$0xff]
        %v1260 = vld [vmem:[#allocation10 + $0x28] sm:$0xff]
        %v1261 = vld [vmem:[#allocation10 + $0x30] sm:$0xff]
        %v1262 = vld [vmem:[#allocation10 + $0x38] sm:$0xff]
        %v1263 = vld [vmem:[#allocation10 + $0x40] sm:$0xff]
        %v1264 = vld [vmem:[#allocation10 + $0x48] sm:$0xff]
        %v1265 = vld [vmem:[#allocation10 + $0x50] sm:$0xff]
        %v1266 = vld [vmem:[#allocation10 + $0x58] sm:$0xff]
        %v1267 = vld [vmem:[#allocation10 + $0x60] sm:$0xff]
        %v1268 = vld [vmem:[#allocation10 + $0x68] sm:$0xff]
        %v1269 = vld [vmem:[#allocation10 + $0x70] sm:$0xff]
        %v1270 = vld [vmem:[#allocation10 + $0x78] sm:$0xff]
        %v1271 = vld [vmem:[#allocation10 + $0x80] sm:$0xff]
        %v1272 = vld [vmem:[#allocation10 + $0x88] sm:$0xff]
        %v1273 = vld [vmem:[#allocation10 + $0x90] sm:$0xff]
        %v1274 = vld [vmem:[#allocation10 + $0x98] sm:$0xff]
        %v1275 = vld [vmem:[#allocation10 + $0xa0] sm:$0xff]
        %v1276 = vld [vmem:[#allocation10 + $0xa8] sm:$0xff]
        %v1277 = vld [vmem:[#allocation10 + $0xb0] sm:$0xff]
        %v1278 = vld [vmem:[#allocation10 + $0xb8] sm:$0xff]
        %v1279 = vld [vmem:[#allocation10 + $0xc0] sm:$0xff]
        %v1280 = vld [vmem:[#allocation10 + $0xc8] sm:$0xff]
        %v1281 = vld [vmem:[#allocation10 + $0xd0] sm:$0xff]
        %v1282 = vld [vmem:[#allocation10 + $0xd8] sm:$0xff]
        %v1283 = vld [vmem:[#allocation10 + $0xe0] sm:$0xff]
        %v1284 = vld [vmem:[#allocation10 + $0xe8] sm:$0xff]
        %v1285 = vld [vmem:[#allocation10 + $0xf0] sm:$0xff]
        %v1286 = vld [vmem:[#allocation10 + $0xf8] sm:$0xff]
        %v1287 = vld [vmem:[#allocation10 + $0x100] sm:$0xff]
        %v1288 = vld [vmem:[#allocation10 + $0x108] sm:$0xff]
        %v1289 = vld [vmem:[#allocation10 + $0x110] sm:$0xff]
        %v1290 = vld [vmem:[#allocation10 + $0x118] sm:$0xff]
        %v1291 = vld [vmem:[#allocation10 + $0x120] sm:$0xff]
        %v1292 = vld [vmem:[#allocation10 + $0x128] sm:$0xff]
        %v1293 = vld [vmem:[#allocation10 + $0x130] sm:$0xff]
        %v1294 = vld [vmem:[#allocation10 + $0x138] sm:$0xff]
        %v1295 = vld [vmem:[#allocation10 + $0x140] sm:$0xff]
        %v1296 = vld [vmem:[#allocation10 + $0x148] sm:$0xff]
        %v1297 = vld [vmem:[#allocation10 + $0x150] sm:$0xff]
        %v1298 = vld [vmem:[#allocation10 + $0x158] sm:$0xff]
        %v1299 = vld [vmem:[#allocation10 + $0x160] sm:$0xff]
        %v1300 = vld [vmem:[#allocation10 + $0x168] sm:$0xff]
        %v1301 = vld [vmem:[#allocation10 + $0x170] sm:$0xff]
        %v1302 = vld [vmem:[#allocation10 + $0x178] sm:$0xff]
        %v1303 = vld [vmem:[#allocation10 + $0x180] sm:$0xff]
        %v1304 = vld [vmem:[#allocation10 + $0x188] sm:$0xff]
        %v1305 = vld [vmem:[#allocation10 + $0x190] sm:$0xff]
        %v1306 = vld [vmem:[#allocation10 + $0x198] sm:$0xff]
        %v1307 = vld [vmem:[#allocation10 + $0x1a0] sm:$0xff]
        %v1308 = vld [vmem:[#allocation10 + $0x1a8] sm:$0xff]
        %v1309 = vld [vmem:[#allocation10 + $0x1b0] sm:$0xff]
        %v1310 = vld [vmem:[#allocation10 + $0x1b8] sm:$0xff]
        %v1311 = vld [vmem:[#allocation10 + $0x1c0] sm:$0xff]
        %v1312 = vld [vmem:[#allocation10 + $0x1c8] sm:$0xff]
        %v1313 = vld [vmem:[#allocation10 + $0x1d0] sm:$0xff]
        %v1314 = vld [vmem:[#allocation10 + $0x1d8] sm:$0xff]
        %v1315 = vld [vmem:[#allocation10 + $0x1e0] sm:$0xff]
        %v1316 = vld [vmem:[#allocation10 + $0x1e8] sm:$0xff]
        %v1317 = vld [vmem:[#allocation10 + $0x1f0] sm:$0xff]
        %v1318 = vld [vmem:[#allocation10 + $0x1f8] sm:$0xff]
        %v1319 = vld [vmem:[#allocation10 + $0x200] sm:$0xff]
        %v1320 = vld [vmem:[#allocation10 + $0x208] sm:$0xff]
        %v1321 = vld [vmem:[#allocation10 + $0x210] sm:$0xff]
        %v1322 = vld [vmem:[#allocation10 + $0x218] sm:$0xff]
        %v1323 = vld [vmem:[#allocation10 + $0x220] sm:$0xff]
        %v1324 = vld [vmem:[#allocation10 + $0x228] sm:$0xff]
        %v1325 = vld [vmem:[#allocation10 + $0x230] sm:$0xff]
        %v1326 = vld [vmem:[#allocation10 + $0x238] sm:$0xff]
        %v1327 = vld [vmem:[#allocation10 + $0x240] sm:$0xff]
        %v1328 = vld [vmem:[#allocation10 + $0x248] sm:$0xff]
        %v1329 = vld [vmem:[#allocation10 + $0x250] sm:$0xff]
        %v1330 = vld [vmem:[#allocation10 + $0x258] sm:$0xff]
        %v1331 = vld [vmem:[#allocation10 + $0x260] sm:$0xff]
        %v1332 = vld [vmem:[#allocation10 + $0x268] sm:$0xff]
        %v1333 = vld [vmem:[#allocation10 + $0x270] sm:$0xff]
        %v1334 = vld [vmem:[#allocation10 + $0x278] sm:$0xff]
        %v1335 = vld [vmem:[%s8] sm:$0x1]
        %v1337 = vperm.slane %v1335, 0
        %1339 = vmatpush.msra.mxu0 %v1270
        %1340 = vmatpush.msra.mxu0 %v1269
        %1341 = vmatpush.msra.mxu0 %v1268
        %1342 = vmatpush.msra.mxu0 %v1267
        %1343 = vmatpush.msra.mxu0 %v1266
        %1344 = vmatpush.msra.mxu0 %v1265
        %1345 = vmatpush.msra.mxu0 %v1264
        %1346 = vmatpush.msra.mxu0 %v1263
        %1347 = vmatpush.msra.mxu0 %v1262
        %1348 = vmatpush.msra.mxu0 %v1261
        %1349 = vmatpush.msra.mxu0 %v1260
        %1350 = vmatpush.msra.mxu0 %v1259
        %1351 = vmatpush.msra.mxu0 %v1258
        %1352 = vmatpush.msra.mxu0 %v1257
        %1353 = vmatpush.msra.mxu0 %v1256
        %1354 = vmatpush.msra.mxu0 %v1255
        %1355 = vmatmul.f32.gmra.mxu0 0.0
        %v1356 = vpop.f32.mrf.mxu0
        %v1357 = vadd.f32 %v1337, %v1356
        %1358 = vmatmul.f32.gmra.mxu0 %v1228
        %v1359 = vpop.f32.mrf.mxu0
        %v1360 = vadd.f32 %v1337, %v1359
        %1361 = vdwg.mxu0
        %1362 = vmatpush.msra.mxu0 %v1286
        %1363 = vmatpush.msra.mxu0 %v1285
        %1364 = vmatpush.msra.mxu0 %v1284
        %1365 = vmatpush.msra.mxu0 %v1283
        %1366 = vmatpush.msra.mxu0 %v1282
        %1367 = vmatpush.msra.mxu0 %v1281
        %1368 = vmatpush.msra.mxu0 %v1280
        %1369 = vmatpush.msra.mxu0 %v1279
        %1370 = vmatpush.msra.mxu0 %v1278
        %1371 = vmatpush.msra.mxu0 %v1277
        %1372 = vmatpush.msra.mxu0 %v1276
        %1373 = vmatpush.msra.mxu0 %v1275
        %1374 = vmatpush.msra.mxu0 %v1274
        %1375 = vmatpush.msra.mxu0 %v1273
        %1376 = vmatpush.msra.mxu0 %v1272
        %1377 = vmatpush.msra.mxu0 %v1271
        %1378 = vmatmul.f32.gmra.mxu0 %v1235
        %v1379 = vpop.f32.mrf.mxu0
        %v1380 = vadd.f32 %v1357, %v1379
        %1381 = vmatmul.f32.gmra.mxu0 %v1237
        %v1382 = vpop.f32.mrf.mxu0
        %v1383 = vadd.f32 %v1360, %v1382
        %1384 = vdwg.mxu0
        %1385 = vmatpush.msra.mxu0 %v1302
        %1386 = vmatpush.msra.mxu0 %v1301
        %1387 = vmatpush.msra.mxu0 %v1300
        %1388 = vmatpush.msra.mxu0 %v1299
        %1389 = vmatpush.msra.mxu0 %v1298
        %1390 = vmatpush.msra.mxu0 %v1297
        %1391 = vmatpush.msra.mxu0 %v1296
        %1392 = vmatpush.msra.mxu0 %v1295
        %1393 = vmatpush.msra.mxu0 %v1294
        %1394 = vmatpush.msra.mxu0 %v1293
        %1395 = vmatpush.msra.mxu0 %v1292
        %1396 = vmatpush.msra.mxu0 %v1291
        %1397 = vmatpush.msra.mxu0 %v1290
        %1398 = vmatpush.msra.mxu0 %v1289
        %1399 = vmatpush.msra.mxu0 %v1288
        %1400 = vmatpush.msra.mxu0 %v1287
        %1401 = vmatmul.f32.gmra.mxu0 %v1242
        %v1402 = vpop.f32.mrf.mxu0
        %v1403 = vadd.f32 %v1380, %v1402
        %1404 = vmatmul.f32.gmra.mxu0 %v1244
        %v1405 = vpop.f32.mrf.mxu0
        %v1406 = vadd.f32 %v1383, %v1405
        %1407 = vdwg.mxu0
        %1408 = vmatpush.msra.mxu0 %v1318
        %1409 = vmatpush.msra.mxu0 %v1317
        %1410 = vmatpush.msra.mxu0 %v1316
        %1411 = vmatpush.msra.mxu0 %v1315
        %1412 = vmatpush.msra.mxu0 %v1314
        %1413 = vmatpush.msra.mxu0 %v1313
        %1414 = vmatpush.msra.mxu0 %v1312
        %1415 = vmatpush.msra.mxu0 %v1311
        %1416 = vmatpush.msra.mxu0 %v1310
        %1417 = vmatpush.msra.mxu0 %v1309
        %1418 = vmatpush.msra.mxu0 %v1308
        %1419 = vmatpush.msra.mxu0 %v1307
        %1420 = vmatpush.msra.mxu0 %v1306
        %1421 = vmatpush.msra.mxu0 %v1305
        %1422 = vmatpush.msra.mxu0 %v1304
        %1423 = vmatpush.msra.mxu0 %v1303
        %1424 = vmatmul.f32.gmra.mxu0 %v1250
        %v1425 = vpop.f32.mrf.mxu0
        %v1426 = vadd.f32 %v1403, %v1425
        %1427 = vmatmul.f32.gmra.mxu0 %v1252
        %v1428 = vpop.f32.mrf.mxu0
        %v1429 = vadd.f32 %v1406, %v1428
        %1430 = vdwg.mxu0
        %1431 = vmatpush.msra.mxu0 %v1334
        %1432 = vmatpush.msra.mxu0 %v1333
        %1433 = vmatpush.msra.mxu0 %v1332
        %1434 = vmatpush.msra.mxu0 %v1331
        %1435 = vmatpush.msra.mxu0 %v1330
        %1436 = vmatpush.msra.mxu0 %v1329
        %1437 = vmatpush.msra.mxu0 %v1328
        %1438 = vmatpush.msra.mxu0 %v1327
        %1439 = vmatpush.msra.mxu0 %v1326
        %1440 = vmatpush.msra.mxu0 %v1325
        %1441 = vmatpush.msra.mxu0 %v1324
        %1442 = vmatpush.msra.mxu0 %v1323
        %1443 = vmatpush.msra.mxu0 %v1322
        %1444 = vmatpush.msra.mxu0 %v1321
        %1445 = vmatpush.msra.mxu0 %v1320
        %1446 = vmatpush.msra.mxu0 %v1319
        %1447 = vmatmul.f32.gmra.mxu0 %v1228
        %v1448 = vpop.f32.mrf.mxu0
        %v1449 = vadd.f32 %v1426, %v1448
        %1450 = vmatmul.f32.gmra.mxu0 %v1229
        %v1451 = vpop.f32.mrf.mxu0
        %v1452 = vadd.f32 %v1429, %v1451
        %1453 = vdwg.mxu0
        %v1454 = vmax.f32 %v1449, 0.0
        %v1455 = vmax.f32 %v1452, 0.0
        %v1458 = vrot.slane %v1454, 2
        %v1459 = vsel %vm721, %v1233, %v1458
        %v1460 = vrot.slane %v1455, 2
        %v1461 = vsel %vm721, %v1458, %v1460
        %v1464 = vrot.slane %v1454, 4
        %v1465 = vsel %vm705, %v1240, %v1464
        %v1466 = vrot.slane %v1455, 4
        %v1467 = vsel %vm705, %v1464, %v1466
        %v1470 = vrot.slane %v1454, 6
        %v1471 = vsel %vm1247, %v1248, %v1470
        %v1472 = vrot.slane %v1455, 6
        %v1473 = vsel %vm1247, %v1470, %v1472
        %v1476 = vld [vmem:[#allocation11] sm:$0xff]
        %v1477 = vld [vmem:[#allocation11 + $0x8] sm:$0xff]
        %v1478 = vld [vmem:[#allocation11 + $0x10] sm:$0xff]
        %v1479 = vld [vmem:[#allocation11 + $0x18] sm:$0xff]
        %v1480 = vld [vmem:[#allocation11 + $0x20] sm:$0xff]
        %v1481 = vld [vmem:[#allocation11 + $0x28] sm:$0xff]
        %v1482 = vld [vmem:[#allocation11 + $0x30] sm:$0xff]
        %v1483 = vld [vmem:[#allocation11 + $0x38] sm:$0xff]
        %v1484 = vld [vmem:[#allocation11 + $0x40] sm:$0xff]
        %v1485 = vld [vmem:[#allocation11 + $0x48] sm:$0xff]
        %v1486 = vld [vmem:[#allocation11 + $0x50] sm:$0xff]
        %v1487 = vld [vmem:[#allocation11 + $0x58] sm:$0xff]
        %v1488 = vld [vmem:[#allocation11 + $0x60] sm:$0xff]
        %v1489 = vld [vmem:[#allocation11 + $0x68] sm:$0xff]
        %v1490 = vld [vmem:[#allocation11 + $0x70] sm:$0xff]
        %v1491 = vld [vmem:[#allocation11 + $0x78] sm:$0xff]
        %v1492 = vld [vmem:[#allocation11 + $0x80] sm:$0xff]
        %v1493 = vld [vmem:[#allocation11 + $0x88] sm:$0xff]
        %v1494 = vld [vmem:[#allocation11 + $0x90] sm:$0xff]
        %v1495 = vld [vmem:[#allocation11 + $0x98] sm:$0xff]
        %v1496 = vld [vmem:[#allocation11 + $0xa0] sm:$0xff]
        %v1497 = vld [vmem:[#allocation11 + $0xa8] sm:$0xff]
        %v1498 = vld [vmem:[#allocation11 + $0xb0] sm:$0xff]
        %v1499 = vld [vmem:[#allocation11 + $0xb8] sm:$0xff]
        %v1500 = vld [vmem:[#allocation11 + $0xc0] sm:$0xff]
        %v1501 = vld [vmem:[#allocation11 + $0xc8] sm:$0xff]
        %v1502 = vld [vmem:[#allocation11 + $0xd0] sm:$0xff]
        %v1503 = vld [vmem:[#allocation11 + $0xd8] sm:$0xff]
        %v1504 = vld [vmem:[#allocation11 + $0xe0] sm:$0xff]
        %v1505 = vld [vmem:[#allocation11 + $0xe8] sm:$0xff]
        %v1506 = vld [vmem:[#allocation11 + $0xf0] sm:$0xff]
        %v1507 = vld [vmem:[#allocation11 + $0xf8] sm:$0xff]
        %v1508 = vld [vmem:[#allocation11 + $0x100] sm:$0xff]
        %v1509 = vld [vmem:[#allocation11 + $0x108] sm:$0xff]
        %v1510 = vld [vmem:[#allocation11 + $0x110] sm:$0xff]
        %v1511 = vld [vmem:[#allocation11 + $0x118] sm:$0xff]
        %v1512 = vld [vmem:[#allocation11 + $0x120] sm:$0xff]
        %v1513 = vld [vmem:[#allocation11 + $0x128] sm:$0xff]
        %v1514 = vld [vmem:[#allocation11 + $0x130] sm:$0xff]
        %v1515 = vld [vmem:[#allocation11 + $0x138] sm:$0xff]
        %v1516 = vld [vmem:[#allocation11 + $0x140] sm:$0xff]
        %v1517 = vld [vmem:[#allocation11 + $0x148] sm:$0xff]
        %v1518 = vld [vmem:[#allocation11 + $0x150] sm:$0xff]
        %v1519 = vld [vmem:[#allocation11 + $0x158] sm:$0xff]
        %v1520 = vld [vmem:[#allocation11 + $0x160] sm:$0xff]
        %v1521 = vld [vmem:[#allocation11 + $0x168] sm:$0xff]
        %v1522 = vld [vmem:[#allocation11 + $0x170] sm:$0xff]
        %v1523 = vld [vmem:[#allocation11 + $0x178] sm:$0xff]
        %v1524 = vld [vmem:[#allocation11 + $0x180] sm:$0xff]
        %v1525 = vld [vmem:[#allocation11 + $0x188] sm:$0xff]
        %v1526 = vld [vmem:[#allocation11 + $0x190] sm:$0xff]
        %v1527 = vld [vmem:[#allocation11 + $0x198] sm:$0xff]
        %v1528 = vld [vmem:[#allocation11 + $0x1a0] sm:$0xff]
        %v1529 = vld [vmem:[#allocation11 + $0x1a8] sm:$0xff]
        %v1530 = vld [vmem:[#allocation11 + $0x1b0] sm:$0xff]
        %v1531 = vld [vmem:[#allocation11 + $0x1b8] sm:$0xff]
        %v1532 = vld [vmem:[#allocation11 + $0x1c0] sm:$0xff]
        %v1533 = vld [vmem:[#allocation11 + $0x1c8] sm:$0xff]
        %v1534 = vld [vmem:[#allocation11 + $0x1d0] sm:$0xff]
        %v1535 = vld [vmem:[#allocation11 + $0x1d8] sm:$0xff]
        %v1536 = vld [vmem:[#allocation11 + $0x1e0] sm:$0xff]
        %v1537 = vld [vmem:[#allocation11 + $0x1e8] sm:$0xff]
        %v1538 = vld [vmem:[#allocation11 + $0x1f0] sm:$0xff]
        %v1539 = vld [vmem:[#allocation11 + $0x1f8] sm:$0xff]
        %v1540 = vld [vmem:[#allocation11 + $0x200] sm:$0xff]
        %v1541 = vld [vmem:[#allocation11 + $0x208] sm:$0xff]
        %v1542 = vld [vmem:[#allocation11 + $0x210] sm:$0xff]
        %v1543 = vld [vmem:[#allocation11 + $0x218] sm:$0xff]
        %v1544 = vld [vmem:[#allocation11 + $0x220] sm:$0xff]
        %v1545 = vld [vmem:[#allocation11 + $0x228] sm:$0xff]
        %v1546 = vld [vmem:[#allocation11 + $0x230] sm:$0xff]
        %v1547 = vld [vmem:[#allocation11 + $0x238] sm:$0xff]
        %v1548 = vld [vmem:[#allocation11 + $0x240] sm:$0xff]
        %v1549 = vld [vmem:[#allocation11 + $0x248] sm:$0xff]
        %v1550 = vld [vmem:[#allocation11 + $0x250] sm:$0xff]
        %v1551 = vld [vmem:[#allocation11 + $0x258] sm:$0xff]
        %v1552 = vld [vmem:[#allocation11 + $0x260] sm:$0xff]
        %v1553 = vld [vmem:[#allocation11 + $0x268] sm:$0xff]
        %v1554 = vld [vmem:[#allocation11 + $0x270] sm:$0xff]
        %v1555 = vld [vmem:[#allocation11 + $0x278] sm:$0xff]
        %v1556 = vld [vmem:[%s10] sm:$0x1]
        %v1558 = vperm.slane %v1556, 0
        %1560 = vmatpush.msra.mxu0 %v1491
        %1561 = vmatpush.msra.mxu0 %v1490
        %1562 = vmatpush.msra.mxu0 %v1489
        %1563 = vmatpush.msra.mxu0 %v1488
        %1564 = vmatpush.msra.mxu0 %v1487
        %1565 = vmatpush.msra.mxu0 %v1486
        %1566 = vmatpush.msra.mxu0 %v1485
        %1567 = vmatpush.msra.mxu0 %v1484
        %1568 = vmatpush.msra.mxu0 %v1483
        %1569 = vmatpush.msra.mxu0 %v1482
        %1570 = vmatpush.msra.mxu0 %v1481
        %1571 = vmatpush.msra.mxu0 %v1480
        %1572 = vmatpush.msra.mxu0 %v1479
        %1573 = vmatpush.msra.mxu0 %v1478
        %1574 = vmatpush.msra.mxu0 %v1477
        %1575 = vmatpush.msra.mxu0 %v1476
        %1576 = vmatmul.f32.gmra.mxu0 0.0
        %v1577 = vpop.f32.mrf.mxu0
        %v1578 = vadd.f32 %v1558, %v1577
        %1579 = vmatmul.f32.gmra.mxu0 %v1454
        %v1580 = vpop.f32.mrf.mxu0
        %v1581 = vadd.f32 %v1558, %v1580
        %1582 = vdwg.mxu0
        %1583 = vmatpush.msra.mxu0 %v1507
        %1584 = vmatpush.msra.mxu0 %v1506
        %1585 = vmatpush.msra.mxu0 %v1505
        %1586 = vmatpush.msra.mxu0 %v1504
        %1587 = vmatpush.msra.mxu0 %v1503
        %1588 = vmatpush.msra.mxu0 %v1502
        %1589 = vmatpush.msra.mxu0 %v1501
        %1590 = vmatpush.msra.mxu0 %v1500
        %1591 = vmatpush.msra.mxu0 %v1499
        %1592 = vmatpush.msra.mxu0 %v1498
        %1593 = vmatpush.msra.mxu0 %v1497
        %1594 = vmatpush.msra.mxu0 %v1496
        %1595 = vmatpush.msra.mxu0 %v1495
        %1596 = vmatpush.msra.mxu0 %v1494
        %1597 = vmatpush.msra.mxu0 %v1493
        %1598 = vmatpush.msra.mxu0 %v1492
        %1599 = vmatmul.f32.gmra.mxu0 %v1459
        %v1600 = vpop.f32.mrf.mxu0
        %v1601 = vadd.f32 %v1578, %v1600
        %1602 = vmatmul.f32.gmra.mxu0 %v1461
        %v1603 = vpop.f32.mrf.mxu0
        %v1604 = vadd.f32 %v1581, %v1603
        %1605 = vdwg.mxu0
        %1606 = vmatpush.msra.mxu0 %v1523
        %1607 = vmatpush.msra.mxu0 %v1522
        %1608 = vmatpush.msra.mxu0 %v1521
        %1609 = vmatpush.msra.mxu0 %v1520
        %1610 = vmatpush.msra.mxu0 %v1519
        %1611 = vmatpush.msra.mxu0 %v1518
        %1612 = vmatpush.msra.mxu0 %v1517
        %1613 = vmatpush.msra.mxu0 %v1516
        %1614 = vmatpush.msra.mxu0 %v1515
        %1615 = vmatpush.msra.mxu0 %v1514
        %1616 = vmatpush.msra.mxu0 %v1513
        %1617 = vmatpush.msra.mxu0 %v1512
        %1618 = vmatpush.msra.mxu0 %v1511
        %1619 = vmatpush.msra.mxu0 %v1510
        %1620 = vmatpush.msra.mxu0 %v1509
        %1621 = vmatpush.msra.mxu0 %v1508
        %1622 = vmatmul.f32.gmra.mxu0 %v1465
        %v1623 = vpop.f32.mrf.mxu0
        %v1624 = vadd.f32 %v1601, %v1623
        %1625 = vmatmul.f32.gmra.mxu0 %v1467
        %v1626 = vpop.f32.mrf.mxu0
        %v1627 = vadd.f32 %v1604, %v1626
        %1628 = vdwg.mxu0
        %1629 = vmatpush.msra.mxu0 %v1539
        %1630 = vmatpush.msra.mxu0 %v1538
        %1631 = vmatpush.msra.mxu0 %v1537
        %1632 = vmatpush.msra.mxu0 %v1536
        %1633 = vmatpush.msra.mxu0 %v1535
        %1634 = vmatpush.msra.mxu0 %v1534
        %1635 = vmatpush.msra.mxu0 %v1533
        %1636 = vmatpush.msra.mxu0 %v1532
        %1637 = vmatpush.msra.mxu0 %v1531
        %1638 = vmatpush.msra.mxu0 %v1530
        %1639 = vmatpush.msra.mxu0 %v1529
        %1640 = vmatpush.msra.mxu0 %v1528
        %1641 = vmatpush.msra.mxu0 %v1527
        %1642 = vmatpush.msra.mxu0 %v1526
        %1643 = vmatpush.msra.mxu0 %v1525
        %1644 = vmatpush.msra.mxu0 %v1524
        %1645 = vmatmul.f32.gmra.mxu0 %v1471
        %v1646 = vpop.f32.mrf.mxu0
        %v1647 = vadd.f32 %v1624, %v1646
        %1648 = vmatmul.f32.gmra.mxu0 %v1473
        %v1649 = vpop.f32.mrf.mxu0
        %v1650 = vadd.f32 %v1627, %v1649
        %1651 = vdwg.mxu0
        %1652 = vmatpush.msra.mxu0 %v1555
        %1653 = vmatpush.msra.mxu0 %v1554
        %1654 = vmatpush.msra.mxu0 %v1553
        %1655 = vmatpush.msra.mxu0 %v1552
        %1656 = vmatpush.msra.mxu0 %v1551
        %1657 = vmatpush.msra.mxu0 %v1550
        %1658 = vmatpush.msra.mxu0 %v1549
        %1659 = vmatpush.msra.mxu0 %v1548
        %1660 = vmatpush.msra.mxu0 %v1547
        %1661 = vmatpush.msra.mxu0 %v1546
        %1662 = vmatpush.msra.mxu0 %v1545
        %1663 = vmatpush.msra.mxu0 %v1544
        %1664 = vmatpush.msra.mxu0 %v1543
        %1665 = vmatpush.msra.mxu0 %v1542
        %1666 = vmatpush.msra.mxu0 %v1541
        %1667 = vmatpush.msra.mxu0 %v1540
        %1668 = vmatmul.f32.gmra.mxu0 %v1454
        %v1669 = vpop.f32.mrf.mxu0
        %v1670 = vadd.f32 %v1647, %v1669
        %1671 = vmatmul.f32.gmra.mxu0 %v1455
        %v1672 = vpop.f32.mrf.mxu0
        %v1673 = vadd.f32 %v1650, %v1672
        %1674 = vdwg.mxu0
        %v1675 = vmax.f32 %v1670, 0.0
        %v1676 = vmax.f32 %v1673, 0.0
        %v1677 = vld [vmem:[#allocation13] sm:$0xff]
        %v1678 = vld [vmem:[#allocation13 + $0x8] sm:$0xff]
        %v1679 = vld [vmem:[#allocation13 + $0x10] sm:$0xff]
        %v1680 = vld [vmem:[#allocation13 + $0x18] sm:$0xff]
        %v1681 = vld [vmem:[#allocation13 + $0x20] sm:$0xff]
        %v1682 = vld [vmem:[#allocation13 + $0x28] sm:$0xff]
        %v1683 = vld [vmem:[#allocation13 + $0x30] sm:$0xff]
        %v1684 = vld [vmem:[#allocation13 + $0x38] sm:$0xff]
        %v1685 = vld [vmem:[#allocation13 + $0x40] sm:$0xff]
        %v1686 = vld [vmem:[#allocation13 + $0x48] sm:$0xff]
        %v1687 = vld [vmem:[#allocation13 + $0x50] sm:$0xff]
        %v1688 = vld [vmem:[#allocation13 + $0x58] sm:$0xff]
        %v1689 = vld [vmem:[#allocation13 + $0x60] sm:$0xff]
        %v1690 = vld [vmem:[#allocation13 + $0x68] sm:$0xff]
        %v1691 = vld [vmem:[#allocation13 + $0x70] sm:$0xff]
        %v1692 = vld [vmem:[#allocation13 + $0x78] sm:$0xff]
        %v1693 = vld [vmem:[%s12] sm:$0x1]
        %v1695 = vperm.slane %v1693, 0
        %1697 = vmatpush.msra.mxu0 %v1692
        %1698 = vmatpush.msra.mxu0 %v1691
        %1699 = vmatpush.msra.mxu0 %v1690
        %1700 = vmatpush.msra.mxu0 %v1689
        %1701 = vmatpush.msra.mxu0 %v1688
        %1702 = vmatpush.msra.mxu0 %v1687
        %1703 = vmatpush.msra.mxu0 %v1686
        %1704 = vmatpush.msra.mxu0 %v1685
        %1705 = vmatpush.msra.mxu0 %v1684
        %1706 = vmatpush.msra.mxu0 %v1683
        %1707 = vmatpush.msra.mxu0 %v1682
        %1708 = vmatpush.msra.mxu0 %v1681
        %1709 = vmatpush.msra.mxu0 %v1680
        %1710 = vmatpush.msra.mxu0 %v1679
        %1711 = vmatpush.msra.mxu0 %v1678
        %1712 = vmatpush.msra.mxu0 %v1677
        %1713 = vmatmul.f32.gmra.mxu0 %v1228
        %v1714 = vpop.f32.mrf.mxu0
        %v1715 = vadd.f32 %v1695, %v1714
        %1716 = vmatmul.f32.gmra.mxu0 %v1229
        %v1717 = vpop.f32.mrf.mxu0
        %v1718 = vadd.f32 %v1695, %v1717
        %1719 = vdwg.mxu0
        %v1720 = vadd.f32 %v1675, %v1715
        %v1721 = vadd.f32 %v1676, %v1718
        %v1722 = vmax.f32 %v1720, 0.0
        %v1723 = vmax.f32 %v1721, 0.0
        %v1725 = vsel %vm705, %v1240, %v1240
        %v1726 = vrot.slane %v1722, 4
        %v1727 = vsel %vm705, %v1240, %v1726
        %v1731 = vrot.slane %v1723, 4
        %v1732 = vsel %vm705, %v1726, %v1731
        %v1734 = vld [vmem:[#allocation14] sm:$0xff]
        %v1735 = vld [vmem:[#allocation14 + $0x8] sm:$0xff]
        %v1736 = vld [vmem:[#allocation14 + $0x10] sm:$0xff]
        %v1737 = vld [vmem:[#allocation14 + $0x18] sm:$0xff]
        %v1738 = vld [vmem:[#allocation14 + $0x20] sm:$0xff]
        %v1739 = vld [vmem:[#allocation14 + $0x28] sm:$0xff]
        %v1740 = vld [vmem:[#allocation14 + $0x30] sm:$0xff]
        %v1741 = vld [vmem:[#allocation14 + $0x38] sm:$0xff]
        %v1742 = vld [vmem:[#allocation14 + $0x40] sm:$0xff]
        %v1743 = vld [vmem:[#allocation14 + $0x48] sm:$0xff]
        %v1744 = vld [vmem:[#allocation14 + $0x50] sm:$0xff]
        %v1745 = vld [vmem:[#allocation14 + $0x58] sm:$0xff]
        %v1746 = vld [vmem:[#allocation14 + $0x60] sm:$0xff]
        %v1747 = vld [vmem:[#allocation14 + $0x68] sm:$0xff]
        %v1748 = vld [vmem:[#allocation14 + $0x70] sm:$0xff]
        %v1749 = vld [vmem:[#allocation14 + $0x78] sm:$0xff]
        %v1750 = vld [vmem:[#allocation14 + $0x80] sm:$0xff]
        %v1751 = vld [vmem:[#allocation14 + $0x88] sm:$0xff]
        %v1752 = vld [vmem:[#allocation14 + $0x90] sm:$0xff]
        %v1753 = vld [vmem:[#allocation14 + $0x98] sm:$0xff]
        %v1754 = vld [vmem:[#allocation14 + $0xa0] sm:$0xff]
        %v1755 = vld [vmem:[#allocation14 + $0xa8] sm:$0xff]
        %v1756 = vld [vmem:[#allocation14 + $0xb0] sm:$0xff]
        %v1757 = vld [vmem:[#allocation14 + $0xb8] sm:$0xff]
        %v1758 = vld [vmem:[#allocation14 + $0xc0] sm:$0xff]
        %v1759 = vld [vmem:[#allocation14 + $0xc8] sm:$0xff]
        %v1760 = vld [vmem:[#allocation14 + $0xd0] sm:$0xff]
        %v1761 = vld [vmem:[#allocation14 + $0xd8] sm:$0xff]
        %v1762 = vld [vmem:[#allocation14 + $0xe0] sm:$0xff]
        %v1763 = vld [vmem:[#allocation14 + $0xe8] sm:$0xff]
        %v1764 = vld [vmem:[#allocation14 + $0xf0] sm:$0xff]
        %v1765 = vld [vmem:[#allocation14 + $0xf8] sm:$0xff]
        %v1766 = vld [vmem:[#allocation14 + $0x100] sm:$0xff]
        %v1767 = vld [vmem:[#allocation14 + $0x108] sm:$0xff]
        %v1768 = vld [vmem:[#allocation14 + $0x110] sm:$0xff]
        %v1769 = vld [vmem:[#allocation14 + $0x118] sm:$0xff]
        %v1770 = vld [vmem:[#allocation14 + $0x120] sm:$0xff]
        %v1771 = vld [vmem:[#allocation14 + $0x128] sm:$0xff]
        %v1772 = vld [vmem:[#allocation14 + $0x130] sm:$0xff]
        %v1773 = vld [vmem:[#allocation14 + $0x138] sm:$0xff]
        %v1774 = vld [vmem:[#allocation14 + $0x140] sm:$0xff]
        %v1775 = vld [vmem:[#allocation14 + $0x148] sm:$0xff]
        %v1776 = vld [vmem:[#allocation14 + $0x150] sm:$0xff]
        %v1777 = vld [vmem:[#allocation14 + $0x158] sm:$0xff]
        %v1778 = vld [vmem:[#allocation14 + $0x160] sm:$0xff]
        %v1779 = vld [vmem:[#allocation14 + $0x168] sm:$0xff]
        %v1780 = vld [vmem:[#allocation14 + $0x170] sm:$0xff]
        %v1781 = vld [vmem:[#allocation14 + $0x178] sm:$0xff]
        %v1782 = vld [vmem:[#allocation14 + $0x180] sm:$0xff]
        %v1783 = vld [vmem:[#allocation14 + $0x188] sm:$0xff]
        %v1784 = vld [vmem:[#allocation14 + $0x190] sm:$0xff]
        %v1785 = vld [vmem:[#allocation14 + $0x198] sm:$0xff]
        %v1786 = vld [vmem:[#allocation14 + $0x1a0] sm:$0xff]
        %v1787 = vld [vmem:[#allocation14 + $0x1a8] sm:$0xff]
        %v1788 = vld [vmem:[#allocation14 + $0x1b0] sm:$0xff]
        %v1789 = vld [vmem:[#allocation14 + $0x1b8] sm:$0xff]
        %v1790 = vld [vmem:[#allocation14 + $0x1c0] sm:$0xff]
        %v1791 = vld [vmem:[#allocation14 + $0x1c8] sm:$0xff]
        %v1792 = vld [vmem:[#allocation14 + $0x1d0] sm:$0xff]
        %v1793 = vld [vmem:[#allocation14 + $0x1d8] sm:$0xff]
        %v1794 = vld [vmem:[#allocation14 + $0x1e0] sm:$0xff]
        %v1795 = vld [vmem:[#allocation14 + $0x1e8] sm:$0xff]
        %v1796 = vld [vmem:[#allocation14 + $0x1f0] sm:$0xff]
        %v1797 = vld [vmem:[#allocation14 + $0x1f8] sm:$0xff]
        %v1798 = vld [vmem:[#allocation14 + $0x200] sm:$0xff]
        %v1799 = vld [vmem:[#allocation14 + $0x208] sm:$0xff]
        %v1800 = vld [vmem:[#allocation14 + $0x210] sm:$0xff]
        %v1801 = vld [vmem:[#allocation14 + $0x218] sm:$0xff]
        %v1802 = vld [vmem:[#allocation14 + $0x220] sm:$0xff]
        %v1803 = vld [vmem:[#allocation14 + $0x228] sm:$0xff]
        %v1804 = vld [vmem:[#allocation14 + $0x230] sm:$0xff]
        %v1805 = vld [vmem:[#allocation14 + $0x238] sm:$0xff]
        %v1806 = vld [vmem:[#allocation14 + $0x240] sm:$0xff]
        %v1807 = vld [vmem:[#allocation14 + $0x248] sm:$0xff]
        %v1808 = vld [vmem:[#allocation14 + $0x250] sm:$0xff]
        %v1809 = vld [vmem:[#allocation14 + $0x258] sm:$0xff]
        %v1810 = vld [vmem:[#allocation14 + $0x260] sm:$0xff]
        %v1811 = vld [vmem:[#allocation14 + $0x268] sm:$0xff]
        %v1812 = vld [vmem:[#allocation14 + $0x270] sm:$0xff]
        %v1813 = vld [vmem:[#allocation14 + $0x278] sm:$0xff]
        %v1814 = vld [vmem:[%s14] sm:$0x1]
        %v1816 = vperm.slane %v1814, 0
        %1818 = vmatpush.msra.mxu0 %v1749
        %1819 = vmatpush.msra.mxu0 %v1748
        %1820 = vmatpush.msra.mxu0 %v1747
        %1821 = vmatpush.msra.mxu0 %v1746
        %1822 = vmatpush.msra.mxu0 %v1745
        %1823 = vmatpush.msra.mxu0 %v1744
        %1824 = vmatpush.msra.mxu0 %v1743
        %1825 = vmatpush.msra.mxu0 %v1742
        %1826 = vmatpush.msra.mxu0 %v1741
        %1827 = vmatpush.msra.mxu0 %v1740
        %1828 = vmatpush.msra.mxu0 %v1739
        %1829 = vmatpush.msra.mxu0 %v1738
        %1830 = vmatpush.msra.mxu0 %v1737
        %1831 = vmatpush.msra.mxu0 %v1736
        %1832 = vmatpush.msra.mxu0 %v1735
        %1833 = vmatpush.msra.mxu0 %v1734
        %1834 = vmatmul.f32.gmra.mxu0 0.0
        %v1835 = vpop.f32.mrf.mxu0
        %v1836 = vadd.f32 %v1816, %v1835
        %1837 = vmatmul.f32.gmra.mxu0 0.0
        %v1838 = vpop.f32.mrf.mxu0
        %v1839 = vadd.f32 %v1816, %v1838
        %1840 = vdwg.mxu0
        %1841 = vmatpush.msra.mxu0 %v1765
        %1842 = vmatpush.msra.mxu0 %v1764
        %1843 = vmatpush.msra.mxu0 %v1763
        %1844 = vmatpush.msra.mxu0 %v1762
        %1845 = vmatpush.msra.mxu0 %v1761
        %1846 = vmatpush.msra.mxu0 %v1760
        %1847 = vmatpush.msra.mxu0 %v1759
        %1848 = vmatpush.msra.mxu0 %v1758
        %1849 = vmatpush.msra.mxu0 %v1757
        %1850 = vmatpush.msra.mxu0 %v1756
        %1851 = vmatpush.msra.mxu0 %v1755
        %1852 = vmatpush.msra.mxu0 %v1754
        %1853 = vmatpush.msra.mxu0 %v1753
        %1854 = vmatpush.msra.mxu0 %v1752
        %1855 = vmatpush.msra.mxu0 %v1751
        %1856 = vmatpush.msra.mxu0 %v1750
        %1857 = vmatmul.f32.gmra.mxu0 %v1725
        %v1858 = vpop.f32.mrf.mxu0
        %v1859 = vadd.f32 %v1836, %v1858
        %1860 = vmatmul.f32.gmra.mxu0 %v1727
        %v1861 = vpop.f32.mrf.mxu0
        %v1862 = vadd.f32 %v1839, %v1861
        %1863 = vdwg.mxu0
        %1864 = vmatpush.msra.mxu0 %v1781
        %1865 = vmatpush.msra.mxu0 %v1780
        %1866 = vmatpush.msra.mxu0 %v1779
        %1867 = vmatpush.msra.mxu0 %v1778
        %1868 = vmatpush.msra.mxu0 %v1777
        %1869 = vmatpush.msra.mxu0 %v1776
        %1870 = vmatpush.msra.mxu0 %v1775
        %1871 = vmatpush.msra.mxu0 %v1774
        %1872 = vmatpush.msra.mxu0 %v1773
        %1873 = vmatpush.msra.mxu0 %v1772
        %1874 = vmatpush.msra.mxu0 %v1771
        %1875 = vmatpush.msra.mxu0 %v1770
        %1876 = vmatpush.msra.mxu0 %v1769
        %1877 = vmatpush.msra.mxu0 %v1768
        %1878 = vmatpush.msra.mxu0 %v1767
        %1879 = vmatpush.msra.mxu0 %v1766
        %1880 = vmatmul.f32.gmra.mxu0 0.0
        %v1881 = vpop.f32.mrf.mxu0
        %v1882 = vadd.f32 %v1859, %v1881
        %1883 = vmatmul.f32.gmra.mxu0 %v1722
        %v1884 = vpop.f32.mrf.mxu0
        %v1885 = vadd.f32 %v1862, %v1884
        %1886 = vdwg.mxu0
        %1887 = vmatpush.msra.mxu0 %v1797
        %1888 = vmatpush.msra.mxu0 %v1796
        %1889 = vmatpush.msra.mxu0 %v1795
        %1890 = vmatpush.msra.mxu0 %v1794
        %1891 = vmatpush.msra.mxu0 %v1793
        %1892 = vmatpush.msra.mxu0 %v1792
        %1893 = vmatpush.msra.mxu0 %v1791
        %1894 = vmatpush.msra.mxu0 %v1790
        %1895 = vmatpush.msra.mxu0 %v1789
        %1896 = vmatpush.msra.mxu0 %v1788
        %1897 = vmatpush.msra.mxu0 %v1787
        %1898 = vmatpush.msra.mxu0 %v1786
        %1899 = vmatpush.msra.mxu0 %v1785
        %1900 = vmatpush.msra.mxu0 %v1784
        %1901 = vmatpush.msra.mxu0 %v1783
        %1902 = vmatpush.msra.mxu0 %v1782
        %1903 = vmatmul.f32.gmra.mxu0 %v1727
        %v1904 = vpop.f32.mrf.mxu0
        %v1905 = vadd.f32 %v1882, %v1904
        %1906 = vmatmul.f32.gmra.mxu0 %v1732
        %v1907 = vpop.f32.mrf.mxu0
        %v1908 = vadd.f32 %v1885, %v1907
        %1909 = vdwg.mxu0
        %1910 = vmatpush.msra.mxu0 %v1813
        %1911 = vmatpush.msra.mxu0 %v1812
        %1912 = vmatpush.msra.mxu0 %v1811
        %1913 = vmatpush.msra.mxu0 %v1810
        %1914 = vmatpush.msra.mxu0 %v1809
        %1915 = vmatpush.msra.mxu0 %v1808
        %1916 = vmatpush.msra.mxu0 %v1807
        %1917 = vmatpush.msra.mxu0 %v1806
        %1918 = vmatpush.msra.mxu0 %v1805
        %1919 = vmatpush.msra.mxu0 %v1804
        %1920 = vmatpush.msra.mxu0 %v1803
        %1921 = vmatpush.msra.mxu0 %v1802
        %1922 = vmatpush.msra.mxu0 %v1801
        %1923 = vmatpush.msra.mxu0 %v1800
        %1924 = vmatpush.msra.mxu0 %v1799
        %1925 = vmatpush.msra.mxu0 %v1798
        %1926 = vmatmul.f32.gmra.mxu0 %v1722
        %v1927 = vpop.f32.mrf.mxu0
        %v1928 = vadd.f32 %v1905, %v1927
        %1929 = vmatmul.f32.gmra.mxu0 %v1723
        %v1930 = vpop.f32.mrf.mxu0
        %v1931 = vadd.f32 %v1908, %v1930
        %1932 = vdwg.mxu0
        %v1933 = vmax.f32 %v1928, 0.0
        %v1934 = vmax.f32 %v1931, 0.0
        %v1936 = vrot.slane %v1933, 4
        %v1937 = vsel %vm705, %v1240, %v1936
        %v1940 = vrot.slane %v1934, 4
        %v1941 = vsel %vm705, %v1936, %v1940
        %v1943 = vld [vmem:[#allocation16] sm:$0xff]
        %v1944 = vld [vmem:[#allocation16 + $0x8] sm:$0xff]
        %v1945 = vld [vmem:[#allocation16 + $0x10] sm:$0xff]
        %v1946 = vld [vmem:[#allocation16 + $0x18] sm:$0xff]
        %v1947 = vld [vmem:[#allocation16 + $0x20] sm:$0xff]
        %v1948 = vld [vmem:[#allocation16 + $0x28] sm:$0xff]
        %v1949 = vld [vmem:[#allocation16 + $0x30] sm:$0xff]
        %v1950 = vld [vmem:[#allocation16 + $0x38] sm:$0xff]
        %v1951 = vld [vmem:[#allocation16 + $0x40] sm:$0xff]
        %v1952 = vld [vmem:[#allocation16 + $0x48] sm:$0xff]
        %v1953 = vld [vmem:[#allocation16 + $0x50] sm:$0xff]
        %v1954 = vld [vmem:[#allocation16 + $0x58] sm:$0xff]
        %v1955 = vld [vmem:[#allocation16 + $0x60] sm:$0xff]
        %v1956 = vld [vmem:[#allocation16 + $0x68] sm:$0xff]
        %v1957 = vld [vmem:[#allocation16 + $0x70] sm:$0xff]
        %v1958 = vld [vmem:[#allocation16 + $0x78] sm:$0xff]
        %v1959 = vld [vmem:[#allocation16 + $0x80] sm:$0xff]
        %v1960 = vld [vmem:[#allocation16 + $0x88] sm:$0xff]
        %v1961 = vld [vmem:[#allocation16 + $0x90] sm:$0xff]
        %v1962 = vld [vmem:[#allocation16 + $0x98] sm:$0xff]
        %v1963 = vld [vmem:[#allocation16 + $0xa0] sm:$0xff]
        %v1964 = vld [vmem:[#allocation16 + $0xa8] sm:$0xff]
        %v1965 = vld [vmem:[#allocation16 + $0xb0] sm:$0xff]
        %v1966 = vld [vmem:[#allocation16 + $0xb8] sm:$0xff]
        %v1967 = vld [vmem:[#allocation16 + $0xc0] sm:$0xff]
        %v1968 = vld [vmem:[#allocation16 + $0xc8] sm:$0xff]
        %v1969 = vld [vmem:[#allocation16 + $0xd0] sm:$0xff]
        %v1970 = vld [vmem:[#allocation16 + $0xd8] sm:$0xff]
        %v1971 = vld [vmem:[#allocation16 + $0xe0] sm:$0xff]
        %v1972 = vld [vmem:[#allocation16 + $0xe8] sm:$0xff]
        %v1973 = vld [vmem:[#allocation16 + $0xf0] sm:$0xff]
        %v1974 = vld [vmem:[#allocation16 + $0xf8] sm:$0xff]
        %v1975 = vld [vmem:[#allocation16 + $0x100] sm:$0xff]
        %v1976 = vld [vmem:[#allocation16 + $0x108] sm:$0xff]
        %v1977 = vld [vmem:[#allocation16 + $0x110] sm:$0xff]
        %v1978 = vld [vmem:[#allocation16 + $0x118] sm:$0xff]
        %v1979 = vld [vmem:[#allocation16 + $0x120] sm:$0xff]
        %v1980 = vld [vmem:[#allocation16 + $0x128] sm:$0xff]
        %v1981 = vld [vmem:[#allocation16 + $0x130] sm:$0xff]
        %v1982 = vld [vmem:[#allocation16 + $0x138] sm:$0xff]
        %v1983 = vld [vmem:[#allocation16 + $0x140] sm:$0xff]
        %v1984 = vld [vmem:[#allocation16 + $0x148] sm:$0xff]
        %v1985 = vld [vmem:[#allocation16 + $0x150] sm:$0xff]
        %v1986 = vld [vmem:[#allocation16 + $0x158] sm:$0xff]
        %v1987 = vld [vmem:[#allocation16 + $0x160] sm:$0xff]
        %v1988 = vld [vmem:[#allocation16 + $0x168] sm:$0xff]
        %v1989 = vld [vmem:[#allocation16 + $0x170] sm:$0xff]
        %v1990 = vld [vmem:[#allocation16 + $0x178] sm:$0xff]
        %v1991 = vld [vmem:[#allocation16 + $0x180] sm:$0xff]
        %v1992 = vld [vmem:[#allocation16 + $0x188] sm:$0xff]
        %v1993 = vld [vmem:[#allocation16 + $0x190] sm:$0xff]
        %v1994 = vld [vmem:[#allocation16 + $0x198] sm:$0xff]
        %v1995 = vld [vmem:[#allocation16 + $0x1a0] sm:$0xff]
        %v1996 = vld [vmem:[#allocation16 + $0x1a8] sm:$0xff]
        %v1997 = vld [vmem:[#allocation16 + $0x1b0] sm:$0xff]
        %v1998 = vld [vmem:[#allocation16 + $0x1b8] sm:$0xff]
        %v1999 = vld [vmem:[#allocation16 + $0x1c0] sm:$0xff]
        %v2000 = vld [vmem:[#allocation16 + $0x1c8] sm:$0xff]
        %v2001 = vld [vmem:[#allocation16 + $0x1d0] sm:$0xff]
        %v2002 = vld [vmem:[#allocation16 + $0x1d8] sm:$0xff]
        %v2003 = vld [vmem:[#allocation16 + $0x1e0] sm:$0xff]
        %v2004 = vld [vmem:[#allocation16 + $0x1e8] sm:$0xff]
        %v2005 = vld [vmem:[#allocation16 + $0x1f0] sm:$0xff]
        %v2006 = vld [vmem:[#allocation16 + $0x1f8] sm:$0xff]
        %v2007 = vld [vmem:[#allocation16 + $0x200] sm:$0xff]
        %v2008 = vld [vmem:[#allocation16 + $0x208] sm:$0xff]
        %v2009 = vld [vmem:[#allocation16 + $0x210] sm:$0xff]
        %v2010 = vld [vmem:[#allocation16 + $0x218] sm:$0xff]
        %v2011 = vld [vmem:[#allocation16 + $0x220] sm:$0xff]
        %v2012 = vld [vmem:[#allocation16 + $0x228] sm:$0xff]
        %v2013 = vld [vmem:[#allocation16 + $0x230] sm:$0xff]
        %v2014 = vld [vmem:[#allocation16 + $0x238] sm:$0xff]
        %v2015 = vld [vmem:[#allocation16 + $0x240] sm:$0xff]
        %v2016 = vld [vmem:[#allocation16 + $0x248] sm:$0xff]
        %v2017 = vld [vmem:[#allocation16 + $0x250] sm:$0xff]
        %v2018 = vld [vmem:[#allocation16 + $0x258] sm:$0xff]
        %v2019 = vld [vmem:[#allocation16 + $0x260] sm:$0xff]
        %v2020 = vld [vmem:[#allocation16 + $0x268] sm:$0xff]
        %v2021 = vld [vmem:[#allocation16 + $0x270] sm:$0xff]
        %v2022 = vld [vmem:[#allocation16 + $0x278] sm:$0xff]
        %v2023 = vld [vmem:[%s16] sm:$0x1]
        %v2025 = vperm.slane %v2023, 0
        %2027 = vmatpush.msra.mxu0 %v1958
        %2028 = vmatpush.msra.mxu0 %v1957
        %2029 = vmatpush.msra.mxu0 %v1956
        %2030 = vmatpush.msra.mxu0 %v1955
        %2031 = vmatpush.msra.mxu0 %v1954
        %2032 = vmatpush.msra.mxu0 %v1953
        %2033 = vmatpush.msra.mxu0 %v1952
        %2034 = vmatpush.msra.mxu0 %v1951
        %2035 = vmatpush.msra.mxu0 %v1950
        %2036 = vmatpush.msra.mxu0 %v1949
        %2037 = vmatpush.msra.mxu0 %v1948
        %2038 = vmatpush.msra.mxu0 %v1947
        %2039 = vmatpush.msra.mxu0 %v1946
        %2040 = vmatpush.msra.mxu0 %v1945
        %2041 = vmatpush.msra.mxu0 %v1944
        %2042 = vmatpush.msra.mxu0 %v1943
        %2043 = vmatmul.f32.gmra.mxu0 0.0
        %v2044 = vpop.f32.mrf.mxu0
        %v2045 = vadd.f32 %v2025, %v2044
        %2046 = vmatmul.f32.gmra.mxu0 0.0
        %v2047 = vpop.f32.mrf.mxu0
        %v2048 = vadd.f32 %v2025, %v2047
        %2049 = vdwg.mxu0
        %2050 = vmatpush.msra.mxu0 %v1974
        %2051 = vmatpush.msra.mxu0 %v1973
        %2052 = vmatpush.msra.mxu0 %v1972
        %2053 = vmatpush.msra.mxu0 %v1971
        %2054 = vmatpush.msra.mxu0 %v1970
        %2055 = vmatpush.msra.mxu0 %v1969
        %2056 = vmatpush.msra.mxu0 %v1968
        %2057 = vmatpush.msra.mxu0 %v1967
        %2058 = vmatpush.msra.mxu0 %v1966
        %2059 = vmatpush.msra.mxu0 %v1965
        %2060 = vmatpush.msra.mxu0 %v1964
        %2061 = vmatpush.msra.mxu0 %v1963
        %2062 = vmatpush.msra.mxu0 %v1962
        %2063 = vmatpush.msra.mxu0 %v1961
        %2064 = vmatpush.msra.mxu0 %v1960
        %2065 = vmatpush.msra.mxu0 %v1959
        %2066 = vmatmul.f32.gmra.mxu0 %v1725
        %v2067 = vpop.f32.mrf.mxu0
        %v2068 = vadd.f32 %v2045, %v2067
        %2069 = vmatmul.f32.gmra.mxu0 %v1937
        %v2070 = vpop.f32.mrf.mxu0
        %v2071 = vadd.f32 %v2048, %v2070
        %2072 = vdwg.mxu0
        %2073 = vmatpush.msra.mxu0 %v1990
        %2074 = vmatpush.msra.mxu0 %v1989
        %2075 = vmatpush.msra.mxu0 %v1988
        %2076 = vmatpush.msra.mxu0 %v1987
        %2077 = vmatpush.msra.mxu0 %v1986
        %2078 = vmatpush.msra.mxu0 %v1985
        %2079 = vmatpush.msra.mxu0 %v1984
        %2080 = vmatpush.msra.mxu0 %v1983
        %2081 = vmatpush.msra.mxu0 %v1982
        %2082 = vmatpush.msra.mxu0 %v1981
        %2083 = vmatpush.msra.mxu0 %v1980
        %2084 = vmatpush.msra.mxu0 %v1979
        %2085 = vmatpush.msra.mxu0 %v1978
        %2086 = vmatpush.msra.mxu0 %v1977
        %2087 = vmatpush.msra.mxu0 %v1976
        %2088 = vmatpush.msra.mxu0 %v1975
        %2089 = vmatmul.f32.gmra.mxu0 0.0
        %v2090 = vpop.f32.mrf.mxu0
        %v2091 = vadd.f32 %v2068, %v2090
        %2092 = vmatmul.f32.gmra.mxu0 %v1933
        %v2093 = vpop.f32.mrf.mxu0
        %v2094 = vadd.f32 %v2071, %v2093
        %2095 = vdwg.mxu0
        %2096 = vmatpush.msra.mxu0 %v2006
        %2097 = vmatpush.msra.mxu0 %v2005
        %2098 = vmatpush.msra.mxu0 %v2004
        %2099 = vmatpush.msra.mxu0 %v2003
        %2100 = vmatpush.msra.mxu0 %v2002
        %2101 = vmatpush.msra.mxu0 %v2001
        %2102 = vmatpush.msra.mxu0 %v2000
        %2103 = vmatpush.msra.mxu0 %v1999
        %2104 = vmatpush.msra.mxu0 %v1998
        %2105 = vmatpush.msra.mxu0 %v1997
        %2106 = vmatpush.msra.mxu0 %v1996
        %2107 = vmatpush.msra.mxu0 %v1995
        %2108 = vmatpush.msra.mxu0 %v1994
        %2109 = vmatpush.msra.mxu0 %v1993
        %2110 = vmatpush.msra.mxu0 %v1992
        %2111 = vmatpush.msra.mxu0 %v1991
        %2112 = vmatmul.f32.gmra.mxu0 %v1937
        %v2113 = vpop.f32.mrf.mxu0
        %v2114 = vadd.f32 %v2091, %v2113
        %2115 = vmatmul.f32.gmra.mxu0 %v1941
        %v2116 = vpop.f32.mrf.mxu0
        %v2117 = vadd.f32 %v2094, %v2116
        %2118 = vdwg.mxu0
        %2119 = vmatpush.msra.mxu0 %v2022
        %2120 = vmatpush.msra.mxu0 %v2021
        %2121 = vmatpush.msra.mxu0 %v2020
        %2122 = vmatpush.msra.mxu0 %v2019
        %2123 = vmatpush.msra.mxu0 %v2018
        %2124 = vmatpush.msra.mxu0 %v2017
        %2125 = vmatpush.msra.mxu0 %v2016
        %2126 = vmatpush.msra.mxu0 %v2015
        %2127 = vmatpush.msra.mxu0 %v2014
        %2128 = vmatpush.msra.mxu0 %v2013
        %2129 = vmatpush.msra.mxu0 %v2012
        %2130 = vmatpush.msra.mxu0 %v2011
        %2131 = vmatpush.msra.mxu0 %v2010
        %2132 = vmatpush.msra.mxu0 %v2009
        %2133 = vmatpush.msra.mxu0 %v2008
        %2134 = vmatpush.msra.mxu0 %v2007
        %2135 = vmatmul.f32.gmra.mxu0 %v1933
        %v2136 = vpop.f32.mrf.mxu0
        %v2137 = vadd.f32 %v2114, %v2136
        %2138 = vmatmul.f32.gmra.mxu0 %v1934
        %v2139 = vpop.f32.mrf.mxu0
        %v2140 = vadd.f32 %v2117, %v2139
        %2141 = vdwg.mxu0
        %v2142 = vmax.f32 %v2137, 0.0
        %v2143 = vmax.f32 %v2140, 0.0
        %v2144 = vadd.f32 %v2142, %v1722
        %v2145 = vadd.f32 %v2143, %v1723
        %v2146 = vmax.f32 %v2144, 0.0
        %v2147 = vmax.f32 %v2145, 0.0
        %2148 = vst [vmem:[%s700] sm:$0xff] %v2146
        %2149 = vst [vmem:[%s700 + $0x8] sm:$0xff] %v2147
        %s2150 = sand.u32 %s408, 1
        %s2151 = scalar_lea.sflag [#allocation4], %s2150
        %s2152 = sand.u32 %s408, 1
        %s2153 = smul.addr %s2152, 16
        %s2154 = scalar_lea.vmem [#allocation17], %s2153
        // Predicated region
        $region125: #{tpu_custom_call.1} parent=87 // pred_check
          %p2155 = pneg %p418
        $region126: #{tpu_custom_call.1} parent=87 // pred_check_branch
          %2157 = sbr.rel (%p2155) target = $region128
        $region127: #{tpu_custom_call.1} parent=87 // pred_region
          %2159 = vsyncadd %s2151, 0
          %s2160 = smul.addr %s38, 2
          %s2161 = smul.addr %s2160, 8
          %s2162 = scalar_lea.hbm %s17, %s2161
          %s2163 = sshll.u32 %s2154, 4
          %s2164 = int_to_ptr.vmem [resolvable:$true] %s2163
          %s2165 = sshll.u32 %s2162, 4
          %s2166 = int_to_ptr.hbm [resolvable:$true] %s2165
          %2171 = dma.vmem_to_hbm [thread:$0]  %s2164, 256, %s2166, %s2151, 128, 128, 8
        $region128: #{tpu_custom_call.1} parent=87 // pred_fallthru
          _
      $region88: #{tpu_custom_call.1} parent=5 // pred_fallthru
        _
      %p2172 = scmp.le.s32.totalorder 2, %s33
      // Predicated region
      $region129: #{tpu_custom_call.1} parent=5 // pred_check
        %p2173 = pneg %p2172
      $region130: #{tpu_custom_call.1} parent=5 // pred_check_branch
        %2175 = sbr.rel (%p2173) target = $region132
      $region131: #{tpu_custom_call.1} parent=5 // pred_region
        %s2176 = ssub.s32 %s33, 2
        // Predicated region
        $region133: #{tpu_custom_call.1} parent=131 // pred_check
          %p2177 = pneg %p424
        $region134: #{tpu_custom_call.1} parent=131 // pred_check_branch
          %2179 = sbr.rel (%p2177) target = $region136
        $region135: #{tpu_custom_call.1} parent=131 // pred_region
          %s2180 = sand.u32 %s409, 1
          %s2181 = scalar_lea.sflag [#allocation4], %s2180
          %s2182 = sand.u32 %s409, 1
          %s2183 = smul.addr %s2182, 16
          %s2184 = scalar_lea.vmem [#allocation17], %s2183
          %2186 = dma.done %s2181, 256
        $region136: #{tpu_custom_call.1} parent=131 // pred_fallthru
          _
      $region132: #{tpu_custom_call.1} parent=5 // pred_fallthru
        _
    $region6: #{tpu_custom_call.1} parent=1 // loop_footer
      %s37 = sadd.s32 1, %s33
    $region7: #{tpu_custom_call.1} parent=1 // loop_footer_branch
      %32 = sbr.rel target = $region3
    $region8: #{tpu_custom_call.1} parent=1 // loop_exit
      _
    %2187 = vsyncpa [#allocation3], 1
    %s2188 = scalar_lea.sflag [#allocation3], 1
    %2189 = vsyncpa %s2188, 1
    %2190 = vsyncpa [#allocation6], 1
    %2191 = vsyncpa [#allocation9], 1
    %2192 = vsyncpa [#allocation12], 1
    %2193 = vsyncpa [#allocation15], 1
    %2194 = vsyncpa [#allocation4], 1
    %s2195 = scalar_lea.sflag [#allocation4], 1
    %2196 = vsyncpa %s2195, 1

</llo_original>
